<compile_context>
chip_gen: v5e
topology: v5e:2x2
jax: 0.10.0
libtpu: 0.0.40
codegen_flags: <defaults>
</compile_context>

<pallas_src>
import functools

import jax
import jax.numpy as jnp
from jax import lax
from jax.experimental import pallas as pl
from jax.experimental.pallas import tpu as pltpu


def gru_forward_kernel(x_ref, w_ih_ref, b_gx_ref, w_hh_ref, b_hn_ref,
                       w_fc_ref, b_fc_ref, w_out_ref, b_out_ref,
                       out_scale_ref, out_shift_ref,
                       o_ref, gx_ref, *, t_unroll):
    # x_ref:   (1, T*Bp, D) bf16, rows time-major within the (8-padded) batch block
    # w_ih_ref:(D, 3H) bf16 (input normalization folded in)
    # b_gx_ref:(1, 3H) f32  (= b_ih(+shift fold) + [b_hr, b_hz, 0])
    # w_hh_ref:(H, 3H) bf16
    # b_hn_ref:(1, H)  f32  (must stay inside the r * (...) product)
    # gx_ref:  (T*Bp, 3H) f32 VMEM scratch, Bp a multiple of 8 (sublane aligned)
    H = w_hh_ref.shape[0]
    Bp = o_ref.shape[1]
    T = gx_ref.shape[0] // Bp

    # ---- Hoisted input projection for ALL timesteps: one MXU matmul, nothing per step.
    x_all = x_ref[0]                                              # (T*Bp, D) bf16
    gx_ref[...] = (jnp.dot(x_all, w_ih_ref[...],
                           preferred_element_type=jnp.float32)
                   + b_gx_ref[...])                               # (T*Bp, 3H) f32

    w_hh = w_hh_ref[...]                                          # (H, 3H) bf16
    b_hn = b_hn_ref[...]                                          # (1, H)  f32

    # ---- Peeled t = 0: h0 == 0 so gh == 0, skip the recurrent matmul entirely.
    gx0 = gx_ref[pl.ds(0, Bp), :]                                 # (Bp, 3H) f32
    rz0 = jax.nn.sigmoid(gx0[:, :2 * H])
    z0 = rz0[:, H:]
    n0 = jnp.tanh(gx0[:, 2 * H:] + rz0[:, :H] * b_hn)
    h = n0 - z0 * n0                                              # blend with h == 0

    def step(t, h):
        start = pl.multiple_of(t * Bp, 8)                         # sublane-aligned
        gx_t = gx_ref[pl.ds(start, Bp), :]                        # (Bp, 3H) f32
        gh = jnp.dot(h.astype(jnp.bfloat16), w_hh,
                     preferred_element_type=jnp.float32)          # (Bp, 3H) f32
        # gates ordered r | z | n ; r,z one contiguous sigmoid slab, n is tanh
        rz = jax.nn.sigmoid(gx_t[:, :2 * H] + gh[:, :2 * H])
        r = rz[:, :H]
        z = rz[:, H:]
        n = jnp.tanh(gx_t[:, 2 * H:] + r * (gh[:, 2 * H:] + b_hn))
        return n + z * (h - n)                                    # == (1-z)*n + z*h

    if T > 1:
        h = lax.fori_loop(1, T, step, h, unroll=t_unroll)

    # nonlinearity on the GRU output at the last timestep == tanh(h_T), then MLP head.
    feat = jnp.tanh(h)                                            # (Bp, H)
    fc = jnp.tanh(jnp.dot(feat.astype(jnp.bfloat16), w_fc_ref[...],
                          preferred_element_type=jnp.float32) + b_fc_ref[...])
    out = jnp.dot(fc.astype(jnp.bfloat16), w_out_ref[...],
                  preferred_element_type=jnp.float32) + b_out_ref[...]
    out = out * out_scale_ref[...] + out_shift_ref[...]
    o_ref[0] = out.astype(o_ref.dtype)


def _num_tensorcores_per_chip():
    # Only 2-TC chips (v7x) benefit from sharding the batch grid; on 1-TC chips the
    # grid is a sequential loop and a split serializes two full recurrences.
    try:
        kind = jax.devices()[0].device_kind.lower()
    except Exception:
        return 1
    return 2 if "v7" in kind else 1


def _vmem_capacity_bytes():
    try:
        return int(pltpu.get_tpu_info().vmem_capacity_bytes)
    except Exception:
        return 64 << 20   # conservative: v7x per-TC VMEM


@jax.jit
def gru_network_forward(x, params):
    # x: (B, T, obs_dim) or (B, obs_dim); returns (B, act_dim)
    if x.ndim == 2:
        x = x[:, None, :]                    # matches PyTorch unsqueeze(1)
    B, T, D = x.shape
    H = params["w_hh"].shape[1]
    M = params["w_fc"].shape[0]
    A = params["w_out"].shape[0]
    H3 = 3 * H

    # Batch-grid split only on 2-TC chips and only when each block stays MXU-friendly.
    n_tc = _num_tensorcores_per_chip()
    nb = 2 if (n_tc >= 2 and B >= 16 and B % 2 == 0) else 1
    Bt = B // nb
    Bp = ((Bt + 7) // 8) * 8                 # sublane-aligned batch block

    f32 = jnp.float32
    bf16 = jnp.bfloat16

    # ---- Fold input normalization into the input projection (fold done in f32, single
    # bf16 cast at the end).
    # TODO(synk): clamp inv_scale if in_scale entries near zero ever matter (bf16 quant).
    inv_scale = 1.0 / (params["in_scale"].astype(f32) + 1e-8)                 # (D,)
    w_ih_f32 = params["w_ih"].astype(f32)                                     # (3H, D)
    w_ih_t = w_ih_f32.T * inv_scale[:, None]                                  # (D, 3H)
    shift_term = (params["in_shift"].astype(f32) * inv_scale) @ w_ih_f32.T    # (3H,)
    b_ih_eff = params["b_ih"].astype(f32) - shift_term
    # r/z hidden biases merged into the hoisted bias; b_hn must stay inside r*(...).
    b_gx = b_ih_eff + jnp.concatenate(
        [params["b_hh"][:2 * H].astype(f32), jnp.zeros((H,), f32)])
    b_hn = params["b_hh"][2 * H:].astype(f32)

    # x -> (nb, T*Bp, D): batch block zero-padded to Bp rows, time-major inside each
    # block, pre-flattened so there is no in-kernel reshape of x.
    x4 = x.reshape(nb, Bt, T, D)
    if Bp != Bt:
        x4 = jnp.pad(x4, ((0, 0), (0, Bp - Bt), (0, 0), (0, 0)))
    x_blocks = x4.transpose(0, 2, 1, 3).reshape(nb, T * Bp, D).astype(bf16)

    args = (
        x_blocks,
        w_ih_t.astype(bf16),                         # (D, 3H)
        b_gx[None, :],                               # (1, 3H)
        params["w_hh"].T.astype(bf16),               # (H, 3H)
        b_hn[None, :],                               # (1, H)
        params["w_fc"].T.astype(bf16),               # (H, M)
        params["b_fc"].astype(f32)[None, :],         # (1, M)
        params["w_out"].T.astype(bf16),              # (M, A)
        params["b_out"].astype(f32)[None, :],        # (1, A)
        params["out_scale"].astype(f32)[None, :],    # (1, A)
        params["out_shift"].astype(f32)[None, :],    # (1, A)
    )

    def full(shape):
        return pl.BlockSpec(shape, lambda b, _s=shape: tuple(0 for _ in _s))

    in_specs = [
        pl.BlockSpec((1, T * Bp, D), lambda b: (b, 0, 0)),
        full((D, H3)),
        full((1, H3)),
        full((H, H3)),
        full((1, H)),
        full((H, M)),
        full((1, M)),
        full((M, A)),
        full((1, A)),
        full((1, A)),
        full((1, A)),
    ]
    # TODO(synk): A=8 output is not lane-dense (masked vst); negligible at this size,
    # pad A toward 128 if the output slab ever becomes non-trivial.
    out_spec = pl.BlockSpec((1, Bp, A), lambda b: (b, 0, 0))

    # Full unroll only for short recurrences; bounded unroll once T gets long enough
    # that full unroll would spill the 64 vregs.
    t_unroll = True if T <= 16 else 8

    # Explicit VMEM budget: double-buffered x block + weights + gx scratch + outputs.
    bytes_weights = sum(int(a.size) * a.dtype.itemsize for a in args[1:])
    bytes_x_blk = T * Bp * D * 2
    bytes_gx = T * Bp * H3 * 4
    bytes_out = Bp * A * 4
    vmem_needed = 2 * bytes_x_blk + 2 * bytes_weights + bytes_gx + 2 * bytes_out
    cap = _vmem_capacity_bytes()
    vmem_limit = int(max(min(vmem_needed + (8 << 20), cap - (8 << 20)), 32 << 20))

    flops = (2 * T * nb * Bp * D * H3 + 2 * max(T - 1, 0) * nb * Bp * H * H3
             + 2 * nb * Bp * H * M + 2 * nb * Bp * M * A)
    transcendentals = T * nb * Bp * H3 + nb * Bp * (H + M)
    bytes_accessed = (sum(int(a.size) * a.dtype.itemsize for a in args)
                      + nb * Bp * A * 4)

    out_blocks = pl.pallas_call(
        functools.partial(gru_forward_kernel, t_unroll=t_unroll),
        out_shape=jax.ShapeDtypeStruct((nb, Bp, A), jnp.float32),
        grid_spec=pltpu.PrefetchScalarGridSpec(
            num_scalar_prefetch=0,
            grid=(nb,),
            in_specs=in_specs,
            out_specs=out_spec,
            scratch_shapes=[pltpu.VMEM((T * Bp, H3), jnp.float32)],
        ),
        compiler_params=pltpu.CompilerParams(
            dimension_semantics=("parallel",),
            vmem_limit_bytes=vmem_limit),
        cost_estimate=pl.CostEstimate(flops=flops,
                                      transcendentals=transcendentals,
                                      bytes_accessed=bytes_accessed),
    )(*args)
    return out_blocks[:, :Bt, :].reshape(B, A)


def gru_network_reference(x, params):
    """Pure-JAX f32 reference matching the PyTorch module's forward."""
    if x.ndim == 2:
        x = x[:, None, :]
    B, T, D = x.shape
    H = params["w_hh"].shape[1]
    xn = (x - params["in_shift"]) / (params["in_scale"] + 1e-8)
    w_ih_t, w_hh_t = params["w_ih"].T, params["w_hh"].T
    h = jnp.zeros((B, H), jnp.float32)
    for t in range(T):
        gx = xn[:, t, :] @ w_ih_t + params["b_ih"]
        gh = h @ w_hh_t + params["b_hh"]
        r = jax.nn.sigmoid(gx[:, :H] + gh[:, :H])
        z = jax.nn.sigmoid(gx[:, H:2 * H] + gh[:, H:2 * H])
        n = jnp.tanh(gx[:, 2 * H:] + r * gh[:, 2 * H:])
        h = (1.0 - z) * n + z * h
    feat = jnp.tanh(h)
    fc = jnp.tanh(feat @ params["w_fc"].T + params["b_fc"])
    out = fc @ params["w_out"].T + params["b_out"]
    return out * params["out_scale"] + params["out_shift"]


def make_params(key, obs_dim, act_dim, gru_hidden=128, mlp_hidden=128):
    """Deterministic init mimicking PyTorch uniform(-1/sqrt(fan), 1/sqrt(fan))."""
    ks = jax.random.split(key, 12)
    k_gru = 1.0 / float(gru_hidden) ** 0.5
    k_fc = 1.0 / float(gru_hidden) ** 0.5
    k_out = 1.0 / float(mlp_hidden) ** 0.5
    u = lambda k, shape, lim: jax.random.uniform(k, shape, jnp.float32, -lim, lim)
    return dict(
        w_ih=u(ks[0], (3 * gru_hidden, obs_dim), k_gru),      # weight_ih_l0 (r|z|n)
        w_hh=u(ks[1], (3 * gru_hidden, gru_hidden), k_gru),   # weight_hh_l0
        b_ih=u(ks[2], (3 * gru_hidden,), k_gru),
        b_hh=u(ks[3], (3 * gru_hidden,), k_gru),
        w_fc=u(ks[4], (mlp_hidden, gru_hidden), k_fc),
        b_fc=u(ks[5], (mlp_hidden,), k_fc),
        w_out=u(ks[6], (act_dim, mlp_hidden), k_out),
        b_out=u(ks[7], (act_dim,), k_out),
        in_shift=0.1 * jax.random.normal(ks[8], (obs_dim,), jnp.float32),
        in_scale=1.0 + 0.1 * jax.random.uniform(ks[9], (obs_dim,), jnp.float32),
        out_shift=0.1 * jax.random.normal(ks[10], (act_dim,), jnp.float32),
        out_scale=1.0 + 0.1 * jax.random.uniform(ks[11], (act_dim,), jnp.float32),
    )


if __name__ == "__main__":
    obs_dim, act_dim = 16, 8
    B, T = 2, 8
    gru_hidden, mlp_hidden = 128, 128   # lane-aligned gate slices (H = 128)

    key = jax.random.PRNGKey(0)
    k_param, k_x = jax.random.split(key)
    params = make_params(k_param, obs_dim, act_dim, gru_hidden, mlp_hidden)
    x = jax.random.normal(k_x, (B, T, obs_dim), jnp.float32)

    out = gru_network_forward(x, params)
    jax.block_until_ready(out)
    assert out.shape == (B, act_dim)

    ref = gru_network_reference(x, params)
    err = float(jnp.max(jnp.abs(out - ref)))
    assert err < 5e-2, f"max abs err {err}"  # bf16-aware bound vs f32 reference

    print("KERNEL_OK")
</pallas_src>

<mosaic_0001>
module attributes {stable_mosaic.version = 11 : i64} {
  func.func @gru_forward_kernel(%arg0: i32, %arg1: memref<1x64x16xbf16, #tpu.memory_space<vmem>>, %arg2: memref<16x384xbf16, #tpu.memory_space<vmem>>, %arg3: memref<1x384xf32, #tpu.memory_space<vmem>>, %arg4: memref<128x384xbf16, #tpu.memory_space<vmem>>, %arg5: memref<1x128xf32, #tpu.memory_space<vmem>>, %arg6: memref<128x128xbf16, #tpu.memory_space<vmem>>, %arg7: memref<1x128xf32, #tpu.memory_space<vmem>>, %arg8: memref<128x8xbf16, #tpu.memory_space<vmem>>, %arg9: memref<1x8xf32, #tpu.memory_space<vmem>>, %arg10: memref<1x8xf32, #tpu.memory_space<vmem>>, %arg11: memref<1x8xf32, #tpu.memory_space<vmem>>, %arg12: memref<1x8x8xf32, #tpu.memory_space<vmem>>, %arg13: memref<64x384xf32, #tpu.memory_space<vmem>>) attributes {dimension_semantics = [#tpu.dimension_semantics<parallel>], iteration_bounds = array<i64: 1>, scalar_prefetch = 0 : i64, scratch_operands = 1 : i64, tpu.core_type = #tpu.core_type<tc>, window_params = [{transform_indices = @transform_0, window_bounds = array<i64: 1, 64, 16>}, {pipeline_mode = #tpu.pipeline_mode<synchronous>, transform_indices = @transform_1, window_bounds = array<i64: 16, 384>}, {pipeline_mode = #tpu.pipeline_mode<synchronous>, transform_indices = @transform_2, window_bounds = array<i64: 1, 384>}, {pipeline_mode = #tpu.pipeline_mode<synchronous>, transform_indices = @transform_3, window_bounds = array<i64: 128, 384>}, {pipeline_mode = #tpu.pipeline_mode<synchronous>, transform_indices = @transform_4, window_bounds = array<i64: 1, 128>}, {pipeline_mode = #tpu.pipeline_mode<synchronous>, transform_indices = @transform_5, window_bounds = array<i64: 128, 128>}, {pipeline_mode = #tpu.pipeline_mode<synchronous>, transform_indices = @transform_6, window_bounds = array<i64: 1, 128>}, {pipeline_mode = #tpu.pipeline_mode<synchronous>, transform_indices = @transform_7, window_bounds = array<i64: 128, 8>}, {pipeline_mode = #tpu.pipeline_mode<synchronous>, transform_indices = @transform_8, window_bounds = array<i64: 1, 8>}, {pipeline_mode = #tpu.pipeline_mode<synchronous>, transform_indices = @transform_9, window_bounds = array<i64: 1, 8>}, {pipeline_mode = #tpu.pipeline_mode<synchronous>, transform_indices = @transform_10, window_bounds = array<i64: 1, 8>}, {transform_indices = @transform_11, window_bounds = array<i64: 1, 8, 8>}]} {
    %c0 = arith.constant 0 : index
    %c0_0 = arith.constant 0 : index
    %c0_1 = arith.constant 0 : index
    %0 = vector.load %arg1[%c0, %c0_0, %c0_1] : memref<1x64x16xbf16, #tpu.memory_space<vmem>>, vector<1x64x16xbf16>
    %1 = vector.shape_cast %0 : vector<1x64x16xbf16> to vector<64x16xbf16>
    %c0_2 = arith.constant 0 : index
    %c0_3 = arith.constant 0 : index
    %2 = vector.load %arg2[%c0_2, %c0_3] : memref<16x384xbf16, #tpu.memory_space<vmem>>, vector<16x384xbf16>
    %cst = arith.constant dense<0.000000e+00> : vector<64x384xf32>
    %3 = tpu.matmul %1, %2, %cst {dimension_numbers = #tpu.dot_dimension_numbers<[1], [0], [0], [1], [0, 0, 1, 1], [], []>} : vector<64x16xbf16>, vector<16x384xbf16>, vector<64x384xf32> -> vector<64x384xf32>
    %c0_4 = arith.constant 0 : index
    %c0_5 = arith.constant 0 : index
    %4 = vector.load %arg3[%c0_4, %c0_5] : memref<1x384xf32, #tpu.memory_space<vmem>>, vector<1x384xf32>
    %5 = vector.broadcast %4 : vector<1x384xf32> to vector<64x384xf32>
    %6 = arith.addf %3, %5 : vector<64x384xf32>
    %c0_6 = arith.constant 0 : index
    %c0_7 = arith.constant 0 : index
    %7 = vector.load %arg13[%c0_6, %c0_7] : memref<64x384xf32, #tpu.memory_space<vmem>>, vector<64x384xf32>
    tpu.vector_store %arg13[%c0_6, %c0_7], %6 {strides = array<i32>} : memref<64x384xf32, #tpu.memory_space<vmem>>, vector<64x384xf32>,
    %c0_8 = arith.constant 0 : index
    %c0_9 = arith.constant 0 : index
    %8 = vector.load %arg4[%c0_8, %c0_9] : memref<128x384xbf16, #tpu.memory_space<vmem>>, vector<128x384xbf16>
    %c0_10 = arith.constant 0 : index
    %c0_11 = arith.constant 0 : index
    %9 = vector.load %arg5[%c0_10, %c0_11] : memref<1x128xf32, #tpu.memory_space<vmem>>, vector<1x128xf32>
    %c0_12 = arith.constant 0 : index
    %c0_13 = arith.constant 0 : index
    %10 = vector.load %arg13[%c0_12, %c0_13] : memref<64x384xf32, #tpu.memory_space<vmem>>, vector<8x384xf32>
    %11 = vector.extract_strided_slice %10 {offsets = [0, 0], sizes = [8, 256], strides = [1, 1]} : vector<8x384xf32> to vector<8x256xf32>
    %12 = arith.negf %11 : vector<8x256xf32>
    %13 = math.exp %12 : vector<8x256xf32>
    %cst_14 = arith.constant 1.000000e+00 : f32
    %14 = vector.broadcast %cst_14 : f32 to vector<8x256xf32>
    %15 = arith.addf %14, %13 : vector<8x256xf32>
    %16 = arith.divf %14, %15 : vector<8x256xf32>
    %17 = vector.extract_strided_slice %16 {offsets = [0, 128], sizes = [8, 128], strides = [1, 1]} : vector<8x256xf32> to vector<8x128xf32>
    %18 = vector.extract_strided_slice %10 {offsets = [0, 256], sizes = [8, 128], strides = [1, 1]} : vector<8x384xf32> to vector<8x128xf32>
    %19 = vector.extract_strided_slice %16 {offsets = [0, 0], sizes = [8, 128], strides = [1, 1]} : vector<8x256xf32> to vector<8x128xf32>
    %20 = vector.broadcast %9 : vector<1x128xf32> to vector<8x128xf32>
    %21 = arith.mulf %19, %20 : vector<8x128xf32>
    %22 = arith.addf %18, %21 : vector<8x128xf32>
    %23 = math.tanh %22 : vector<8x128xf32>
    %24 = arith.mulf %17, %23 : vector<8x128xf32>
    %25 = arith.subf %23, %24 : vector<8x128xf32>
    %c1_i32 = arith.constant 1 : i32
    %c8_i32 = arith.constant 8 : i32
    %26 = arith.muli %c1_i32, %c8_i32 : i32
    %27 = tpu.assume_multiple %26, 8 : i32
    %28 = arith.index_cast %27 : i32 to index
    %c0_15 = arith.constant 0 : index
    %29 = vector.load %arg13[%28, %c0_15] : memref<64x384xf32, #tpu.memory_space<vmem>>, vector<8x384xf32>
    %30 = arith.truncf %25 : vector<8x128xf32> to vector<8x128xbf16>
    %cst_16 = arith.constant dense<0.000000e+00> : vector<8x384xf32>
    %31 = tpu.matmul %30, %8, %cst_16 {dimension_numbers = #tpu.dot_dimension_numbers<[1], [0], [0], [1], [0, 0, 1, 1], [], []>} : vector<8x128xbf16>, vector<128x384xbf16>, vector<8x384xf32> -> vector<8x384xf32>
    %32 = vector.extract_strided_slice %29 {offsets = [0, 0], sizes = [8, 256], strides = [1, 1]} : vector<8x384xf32> to vector<8x256xf32>
    %33 = vector.extract_strided_slice %31 {offsets = [0, 0], sizes = [8, 256], strides = [1, 1]} : vector<8x384xf32> to vector<8x256xf32>
    %34 = arith.addf %32, %33 : vector<8x256xf32>
    %35 = arith.negf %34 : vector<8x256xf32>
    %36 = math.exp %35 : vector<8x256xf32>
    %cst_17 = arith.constant 1.000000e+00 : f32
    %37 = vector.broadcast %cst_17 : f32 to vector<8x256xf32>
    %38 = arith.addf %37, %36 : vector<8x256xf32>
    %39 = arith.divf %37, %38 : vector<8x256xf32>
    %40 = vector.extract_strided_slice %39 {offsets = [0, 0], sizes = [8, 128], strides = [1, 1]} : vector<8x256xf32> to vector<8x128xf32>
    %41 = vector.extract_strided_slice %39 {offsets = [0, 128], sizes = [8, 128], strides = [1, 1]} : vector<8x256xf32> to vector<8x128xf32>
    %42 = vector.extract_strided_slice %29 {offsets = [0, 256], sizes = [8, 128], strides = [1, 1]} : vector<8x384xf32> to vector<8x128xf32>
    %43 = vector.extract_strided_slice %31 {offsets = [0, 256], sizes = [8, 128], strides = [1, 1]} : vector<8x384xf32> to vector<8x128xf32>
    %44 = vector.broadcast %9 : vector<1x128xf32> to vector<8x128xf32>
    %45 = arith.addf %43, %44 : vector<8x128xf32>
    %46 = arith.mulf %40, %45 : vector<8x128xf32>
    %47 = arith.addf %42, %46 : vector<8x128xf32>
    %48 = math.tanh %47 : vector<8x128xf32>
    %49 = arith.subf %25, %48 : vector<8x128xf32>
    %50 = arith.mulf %41, %49 : vector<8x128xf32>
    %51 = arith.addf %48, %50 : vector<8x128xf32>
    %c2_i32 = arith.constant 2 : i32
    %c8_i32_18 = arith.constant 8 : i32
    %52 = arith.muli %c2_i32, %c8_i32_18 : i32
    %53 = tpu.assume_multiple %52, 8 : i32
    %54 = arith.index_cast %53 : i32 to index
    %c0_19 = arith.constant 0 : index
    %55 = vector.load %arg13[%54, %c0_19] : memref<64x384xf32, #tpu.memory_space<vmem>>, vector<8x384xf32>
    %56 = arith.truncf %51 : vector<8x128xf32> to vector<8x128xbf16>
    %cst_20 = arith.constant dense<0.000000e+00> : vector<8x384xf32>
    %57 = tpu.matmul %56, %8, %cst_20 {dimension_numbers = #tpu.dot_dimension_numbers<[1], [0], [0], [1], [0, 0, 1, 1], [], []>} : vector<8x128xbf16>, vector<128x384xbf16>, vector<8x384xf32> -> vector<8x384xf32>
    %58 = vector.extract_strided_slice %55 {offsets = [0, 0], sizes = [8, 256], strides = [1, 1]} : vector<8x384xf32> to vector<8x256xf32>
    %59 = vector.extract_strided_slice %57 {offsets = [0, 0], sizes = [8, 256], strides = [1, 1]} : vector<8x384xf32> to vector<8x256xf32>
    %60 = arith.addf %58, %59 : vector<8x256xf32>
    %61 = arith.negf %60 : vector<8x256xf32>
    %62 = math.exp %61 : vector<8x256xf32>
    %cst_21 = arith.constant 1.000000e+00 : f32
    %63 = vector.broadcast %cst_21 : f32 to vector<8x256xf32>
    %64 = arith.addf %63, %62 : vector<8x256xf32>
    %65 = arith.divf %63, %64 : vector<8x256xf32>
    %66 = vector.extract_strided_slice %65 {offsets = [0, 0], sizes = [8, 128], strides = [1, 1]} : vector<8x256xf32> to vector<8x128xf32>
    %67 = vector.extract_strided_slice %65 {offsets = [0, 128], sizes = [8, 128], strides = [1, 1]} : vector<8x256xf32> to vector<8x128xf32>
    %68 = vector.extract_strided_slice %55 {offsets = [0, 256], sizes = [8, 128], strides = [1, 1]} : vector<8x384xf32> to vector<8x128xf32>
    %69 = vector.extract_strided_slice %57 {offsets = [0, 256], sizes = [8, 128], strides = [1, 1]} : vector<8x384xf32> to vector<8x128xf32>
    %70 = vector.broadcast %9 : vector<1x128xf32> to vector<8x128xf32>
    %71 = arith.addf %69, %70 : vector<8x128xf32>
    %72 = arith.mulf %66, %71 : vector<8x128xf32>
    %73 = arith.addf %68, %72 : vector<8x128xf32>
    %74 = math.tanh %73 : vector<8x128xf32>
    %75 = arith.subf %51, %74 : vector<8x128xf32>
    %76 = arith.mulf %67, %75 : vector<8x128xf32>
    %77 = arith.addf %74, %76 : vector<8x128xf32>
    %c3_i32 = arith.constant 3 : i32
    %c8_i32_22 = arith.constant 8 : i32
    %78 = arith.muli %c3_i32, %c8_i32_22 : i32
    %79 = tpu.assume_multiple %78, 8 : i32
    %80 = arith.index_cast %79 : i32 to index
    %c0_23 = arith.constant 0 : index
    %81 = vector.load %arg13[%80, %c0_23] : memref<64x384xf32, #tpu.memory_space<vmem>>, vector<8x384xf32>
    %82 = arith.truncf %77 : vector<8x128xf32> to vector<8x128xbf16>
    %cst_24 = arith.constant dense<0.000000e+00> : vector<8x384xf32>
    %83 = tpu.matmul %82, %8, %cst_24 {dimension_numbers = #tpu.dot_dimension_numbers<[1], [0], [0], [1], [0, 0, 1, 1], [], []>} : vector<8x128xbf16>, vector<128x384xbf16>, vector<8x384xf32> -> vector<8x384xf32>
    %84 = vector.extract_strided_slice %81 {offsets = [0, 0], sizes = [8, 256], strides = [1, 1]} : vector<8x384xf32> to vector<8x256xf32>
    %85 = vector.extract_strided_slice %83 {offsets = [0, 0], sizes = [8, 256], strides = [1, 1]} : vector<8x384xf32> to vector<8x256xf32>
    %86 = arith.addf %84, %85 : vector<8x256xf32>
    %87 = arith.negf %86 : vector<8x256xf32>
    %88 = math.exp %87 : vector<8x256xf32>
    %cst_25 = arith.constant 1.000000e+00 : f32
    %89 = vector.broadcast %cst_25 : f32 to vector<8x256xf32>
    %90 = arith.addf %89, %88 : vector<8x256xf32>
    %91 = arith.divf %89, %90 : vector<8x256xf32>
    %92 = vector.extract_strided_slice %91 {offsets = [0, 0], sizes = [8, 128], strides = [1, 1]} : vector<8x256xf32> to vector<8x128xf32>
    %93 = vector.extract_strided_slice %91 {offsets = [0, 128], sizes = [8, 128], strides = [1, 1]} : vector<8x256xf32> to vector<8x128xf32>
    %94 = vector.extract_strided_slice %81 {offsets = [0, 256], sizes = [8, 128], strides = [1, 1]} : vector<8x384xf32> to vector<8x128xf32>
    %95 = vector.extract_strided_slice %83 {offsets = [0, 256], sizes = [8, 128], strides = [1, 1]} : vector<8x384xf32> to vector<8x128xf32>
    %96 = vector.broadcast %9 : vector<1x128xf32> to vector<8x128xf32>
    %97 = arith.addf %95, %96 : vector<8x128xf32>
    %98 = arith.mulf %92, %97 : vector<8x128xf32>
    %99 = arith.addf %94, %98 : vector<8x128xf32>
    %100 = math.tanh %99 : vector<8x128xf32>
    %101 = arith.subf %77, %100 : vector<8x128xf32>
    %102 = arith.mulf %93, %101 : vector<8x128xf32>
    %103 = arith.addf %100, %102 : vector<8x128xf32>
    %c4_i32 = arith.constant 4 : i32
    %c8_i32_26 = arith.constant 8 : i32
    %104 = arith.muli %c4_i32, %c8_i32_26 : i32
    %105 = tpu.assume_multiple %104, 8 : i32
    %106 = arith.index_cast %105 : i32 to index
    %c0_27 = arith.constant 0 : index
    %107 = vector.load %arg13[%106, %c0_27] : memref<64x384xf32, #tpu.memory_space<vmem>>, vector<8x384xf32>
    %108 = arith.truncf %103 : vector<8x128xf32> to vector<8x128xbf16>
    %cst_28 = arith.constant dense<0.000000e+00> : vector<8x384xf32>
    %109 = tpu.matmul %108, %8, %cst_28 {dimension_numbers = #tpu.dot_dimension_numbers<[1], [0], [0], [1], [0, 0, 1, 1], [], []>} : vector<8x128xbf16>, vector<128x384xbf16>, vector<8x384xf32> -> vector<8x384xf32>
    %110 = vector.extract_strided_slice %107 {offsets = [0, 0], sizes = [8, 256], strides = [1, 1]} : vector<8x384xf32> to vector<8x256xf32>
    %111 = vector.extract_strided_slice %109 {offsets = [0, 0], sizes = [8, 256], strides = [1, 1]} : vector<8x384xf32> to vector<8x256xf32>
    %112 = arith.addf %110, %111 : vector<8x256xf32>
    %113 = arith.negf %112 : vector<8x256xf32>
    %114 = math.exp %113 : vector<8x256xf32>
    %cst_29 = arith.constant 1.000000e+00 : f32
    %115 = vector.broadcast %cst_29 : f32 to vector<8x256xf32>
    %116 = arith.addf %115, %114 : vector<8x256xf32>
    %117 = arith.divf %115, %116 : vector<8x256xf32>
    %118 = vector.extract_strided_slice %117 {offsets = [0, 0], sizes = [8, 128], strides = [1, 1]} : vector<8x256xf32> to vector<8x128xf32>
    %119 = vector.extract_strided_slice %117 {offsets = [0, 128], sizes = [8, 128], strides = [1, 1]} : vector<8x256xf32> to vector<8x128xf32>
    %120 = vector.extract_strided_slice %107 {offsets = [0, 256], sizes = [8, 128], strides = [1, 1]} : vector<8x384xf32> to vector<8x128xf32>
    %121 = vector.extract_strided_slice %109 {offsets = [0, 256], sizes = [8, 128], strides = [1, 1]} : vector<8x384xf32> to vector<8x128xf32>
    %122 = vector.broadcast %9 : vector<1x128xf32> to vector<8x128xf32>
    %123 = arith.addf %121, %122 : vector<8x128xf32>
    %124 = arith.mulf %118, %123 : vector<8x128xf32>
    %125 = arith.addf %120, %124 : vector<8x128xf32>
    %126 = math.tanh %125 : vector<8x128xf32>
    %127 = arith.subf %103, %126 : vector<8x128xf32>
    %128 = arith.mulf %119, %127 : vector<8x128xf32>
    %129 = arith.addf %126, %128 : vector<8x128xf32>
    %c5_i32 = arith.constant 5 : i32
    %c8_i32_30 = arith.constant 8 : i32
    %130 = arith.muli %c5_i32, %c8_i32_30 : i32
    %131 = tpu.assume_multiple %130, 8 : i32
    %132 = arith.index_cast %131 : i32 to index
    %c0_31 = arith.constant 0 : index
    %133 = vector.load %arg13[%132, %c0_31] : memref<64x384xf32, #tpu.memory_space<vmem>>, vector<8x384xf32>
    %134 = arith.truncf %129 : vector<8x128xf32> to vector<8x128xbf16>
    %cst_32 = arith.constant dense<0.000000e+00> : vector<8x384xf32>
    %135 = tpu.matmul %134, %8, %cst_32 {dimension_numbers = #tpu.dot_dimension_numbers<[1], [0], [0], [1], [0, 0, 1, 1], [], []>} : vector<8x128xbf16>, vector<128x384xbf16>, vector<8x384xf32> -> vector<8x384xf32>
    %136 = vector.extract_strided_slice %133 {offsets = [0, 0], sizes = [8, 256], strides = [1, 1]} : vector<8x384xf32> to vector<8x256xf32>
    %137 = vector.extract_strided_slice %135 {offsets = [0, 0], sizes = [8, 256], strides = [1, 1]} : vector<8x384xf32> to vector<8x256xf32>
    %138 = arith.addf %136, %137 : vector<8x256xf32>
    %139 = arith.negf %138 : vector<8x256xf32>
    %140 = math.exp %139 : vector<8x256xf32>
    %cst_33 = arith.constant 1.000000e+00 : f32
    %141 = vector.broadcast %cst_33 : f32 to vector<8x256xf32>
    %142 = arith.addf %141, %140 : vector<8x256xf32>
    %143 = arith.divf %141, %142 : vector<8x256xf32>
    %144 = vector.extract_strided_slice %143 {offsets = [0, 0], sizes = [8, 128], strides = [1, 1]} : vector<8x256xf32> to vector<8x128xf32>
    %145 = vector.extract_strided_slice %143 {offsets = [0, 128], sizes = [8, 128], strides = [1, 1]} : vector<8x256xf32> to vector<8x128xf32>
    %146 = vector.extract_strided_slice %133 {offsets = [0, 256], sizes = [8, 128], strides = [1, 1]} : vector<8x384xf32> to vector<8x128xf32>
    %147 = vector.extract_strided_slice %135 {offsets = [0, 256], sizes = [8, 128], strides = [1, 1]} : vector<8x384xf32> to vector<8x128xf32>
    %148 = vector.broadcast %9 : vector<1x128xf32> to vector<8x128xf32>
    %149 = arith.addf %147, %148 : vector<8x128xf32>
    %150 = arith.mulf %144, %149 : vector<8x128xf32>
    %151 = arith.addf %146, %150 : vector<8x128xf32>
    %152 = math.tanh %151 : vector<8x128xf32>
    %153 = arith.subf %129, %152 : vector<8x128xf32>
    %154 = arith.mulf %145, %153 : vector<8x128xf32>
    %155 = arith.addf %152, %154 : vector<8x128xf32>
    %c6_i32 = arith.constant 6 : i32
    %c8_i32_34 = arith.constant 8 : i32
    %156 = arith.muli %c6_i32, %c8_i32_34 : i32
    %157 = tpu.assume_multiple %156, 8 : i32
    %158 = arith.index_cast %157 : i32 to index
    %c0_35 = arith.constant 0 : index
    %159 = vector.load %arg13[%158, %c0_35] : memref<64x384xf32, #tpu.memory_space<vmem>>, vector<8x384xf32>
    %160 = arith.truncf %155 : vector<8x128xf32> to vector<8x128xbf16>
    %cst_36 = arith.constant dense<0.000000e+00> : vector<8x384xf32>
    %161 = tpu.matmul %160, %8, %cst_36 {dimension_numbers = #tpu.dot_dimension_numbers<[1], [0], [0], [1], [0, 0, 1, 1], [], []>} : vector<8x128xbf16>, vector<128x384xbf16>, vector<8x384xf32> -> vector<8x384xf32>
    %162 = vector.extract_strided_slice %159 {offsets = [0, 0], sizes = [8, 256], strides = [1, 1]} : vector<8x384xf32> to vector<8x256xf32>
    %163 = vector.extract_strided_slice %161 {offsets = [0, 0], sizes = [8, 256], strides = [1, 1]} : vector<8x384xf32> to vector<8x256xf32>
    %164 = arith.addf %162, %163 : vector<8x256xf32>
    %165 = arith.negf %164 : vector<8x256xf32>
    %166 = math.exp %165 : vector<8x256xf32>
    %cst_37 = arith.constant 1.000000e+00 : f32
    %167 = vector.broadcast %cst_37 : f32 to vector<8x256xf32>
    %168 = arith.addf %167, %166 : vector<8x256xf32>
    %169 = arith.divf %167, %168 : vector<8x256xf32>
    %170 = vector.extract_strided_slice %169 {offsets = [0, 0], sizes = [8, 128], strides = [1, 1]} : vector<8x256xf32> to vector<8x128xf32>
    %171 = vector.extract_strided_slice %169 {offsets = [0, 128], sizes = [8, 128], strides = [1, 1]} : vector<8x256xf32> to vector<8x128xf32>
    %172 = vector.extract_strided_slice %159 {offsets = [0, 256], sizes = [8, 128], strides = [1, 1]} : vector<8x384xf32> to vector<8x128xf32>
    %173 = vector.extract_strided_slice %161 {offsets = [0, 256], sizes = [8, 128], strides = [1, 1]} : vector<8x384xf32> to vector<8x128xf32>
    %174 = vector.broadcast %9 : vector<1x128xf32> to vector<8x128xf32>
    %175 = arith.addf %173, %174 : vector<8x128xf32>
    %176 = arith.mulf %170, %175 : vector<8x128xf32>
    %177 = arith.addf %172, %176 : vector<8x128xf32>
    %178 = math.tanh %177 : vector<8x128xf32>
    %179 = arith.subf %155, %178 : vector<8x128xf32>
    %180 = arith.mulf %171, %179 : vector<8x128xf32>
    %181 = arith.addf %178, %180 : vector<8x128xf32>
    %c7_i32 = arith.constant 7 : i32
    %c8_i32_38 = arith.constant 8 : i32
    %182 = arith.muli %c7_i32, %c8_i32_38 : i32
    %183 = tpu.assume_multiple %182, 8 : i32
    %184 = arith.index_cast %183 : i32 to index
    %c0_39 = arith.constant 0 : index
    %185 = vector.load %arg13[%184, %c0_39] : memref<64x384xf32, #tpu.memory_space<vmem>>, vector<8x384xf32>
    %186 = arith.truncf %181 : vector<8x128xf32> to vector<8x128xbf16>
    %cst_40 = arith.constant dense<0.000000e+00> : vector<8x384xf32>
    %187 = tpu.matmul %186, %8, %cst_40 {dimension_numbers = #tpu.dot_dimension_numbers<[1], [0], [0], [1], [0, 0, 1, 1], [], []>} : vector<8x128xbf16>, vector<128x384xbf16>, vector<8x384xf32> -> vector<8x384xf32>
    %188 = vector.extract_strided_slice %185 {offsets = [0, 0], sizes = [8, 256], strides = [1, 1]} : vector<8x384xf32> to vector<8x256xf32>
    %189 = vector.extract_strided_slice %187 {offsets = [0, 0], sizes = [8, 256], strides = [1, 1]} : vector<8x384xf32> to vector<8x256xf32>
    %190 = arith.addf %188, %189 : vector<8x256xf32>
    %191 = arith.negf %190 : vector<8x256xf32>
    %192 = math.exp %191 : vector<8x256xf32>
    %cst_41 = arith.constant 1.000000e+00 : f32
    %193 = vector.broadcast %cst_41 : f32 to vector<8x256xf32>
    %194 = arith.addf %193, %192 : vector<8x256xf32>
    %195 = arith.divf %193, %194 : vector<8x256xf32>
    %196 = vector.extract_strided_slice %195 {offsets = [0, 0], sizes = [8, 128], strides = [1, 1]} : vector<8x256xf32> to vector<8x128xf32>
    %197 = vector.extract_strided_slice %195 {offsets = [0, 128], sizes = [8, 128], strides = [1, 1]} : vector<8x256xf32> to vector<8x128xf32>
    %198 = vector.extract_strided_slice %185 {offsets = [0, 256], sizes = [8, 128], strides = [1, 1]} : vector<8x384xf32> to vector<8x128xf32>
    %199 = vector.extract_strided_slice %187 {offsets = [0, 256], sizes = [8, 128], strides = [1, 1]} : vector<8x384xf32> to vector<8x128xf32>
    %200 = vector.broadcast %9 : vector<1x128xf32> to vector<8x128xf32>
    %201 = arith.addf %199, %200 : vector<8x128xf32>
    %202 = arith.mulf %196, %201 : vector<8x128xf32>
    %203 = arith.addf %198, %202 : vector<8x128xf32>
    %204 = math.tanh %203 : vector<8x128xf32>
    %205 = arith.subf %181, %204 : vector<8x128xf32>
    %206 = arith.mulf %197, %205 : vector<8x128xf32>
    %207 = arith.addf %204, %206 : vector<8x128xf32>
    %c7_i32_42 = arith.constant 7 : i32
    %208 = math.tanh %207 : vector<8x128xf32>
    %209 = arith.truncf %208 : vector<8x128xf32> to vector<8x128xbf16>
    %c0_43 = arith.constant 0 : index
    %c0_44 = arith.constant 0 : index
    %210 = vector.load %arg6[%c0_43, %c0_44] : memref<128x128xbf16, #tpu.memory_space<vmem>>, vector<128x128xbf16>
    %cst_45 = arith.constant dense<0.000000e+00> : vector<8x128xf32>
    %211 = tpu.matmul %209, %210, %cst_45 {dimension_numbers = #tpu.dot_dimension_numbers<[1], [0], [0], [1], [0, 0, 1, 1], [], []>} : vector<8x128xbf16>, vector<128x128xbf16>, vector<8x128xf32> -> vector<8x128xf32>
    %c0_46 = arith.constant 0 : index
    %c0_47 = arith.constant 0 : index
    %212 = vector.load %arg7[%c0_46, %c0_47] : memref<1x128xf32, #tpu.memory_space<vmem>>, vector<1x128xf32>
    %213 = vector.broadcast %212 : vector<1x128xf32> to vector<8x128xf32>
    %214 = arith.addf %211, %213 : vector<8x128xf32>
    %215 = math.tanh %214 : vector<8x128xf32>
    %216 = arith.truncf %215 : vector<8x128xf32> to vector<8x128xbf16>
    %c0_48 = arith.constant 0 : index
    %c0_49 = arith.constant 0 : index
    %217 = vector.load %arg8[%c0_48, %c0_49] : memref<128x8xbf16, #tpu.memory_space<vmem>>, vector<128x8xbf16>
    %cst_50 = arith.constant dense<0.000000e+00> : vector<8x8xf32>
    %218 = tpu.matmul %216, %217, %cst_50 {dimension_numbers = #tpu.dot_dimension_numbers<[1], [0], [0], [1], [0, 0, 1, 1], [], []>} : vector<8x128xbf16>, vector<128x8xbf16>, vector<8x8xf32> -> vector<8x8xf32>
    %c0_51 = arith.constant 0 : index
    %c0_52 = arith.constant 0 : index
    %219 = vector.load %arg9[%c0_51, %c0_52] : memref<1x8xf32, #tpu.memory_space<vmem>>, vector<1x8xf32>
    %220 = vector.broadcast %219 : vector<1x8xf32> to vector<8x8xf32>
    %221 = arith.addf %218, %220 : vector<8x8xf32>
    %c0_53 = arith.constant 0 : index
    %c0_54 = arith.constant 0 : index
    %222 = vector.load %arg10[%c0_53, %c0_54] : memref<1x8xf32, #tpu.memory_space<vmem>>, vector<1x8xf32>
    %223 = vector.broadcast %222 : vector<1x8xf32> to vector<8x8xf32>
    %224 = arith.mulf %221, %223 : vector<8x8xf32>
    %c0_55 = arith.constant 0 : index
    %c0_56 = arith.constant 0 : index
    %225 = vector.load %arg11[%c0_55, %c0_56] : memref<1x8xf32, #tpu.memory_space<vmem>>, vector<1x8xf32>
    %226 = vector.broadcast %225 : vector<1x8xf32> to vector<8x8xf32>
    %227 = arith.addf %224, %226 : vector<8x8xf32>
    %c0_57 = arith.constant 0 : index
    %c0_58 = arith.constant 0 : index
    %c0_59 = arith.constant 0 : index
    %228 = vector.load %arg12[%c0_57, %c0_58, %c0_59] : memref<1x8x8xf32, #tpu.memory_space<vmem>>, vector<1x8x8xf32>
    %229 = vector.shape_cast %228 : vector<1x8x8xf32> to vector<8x8xf32>
    %230 = vector.shape_cast %227 : vector<8x8xf32> to vector<1x8x8xf32>
    tpu.vector_store %arg12[%c0_57, %c0_58, %c0_59], %230 {strides = array<i32>} : memref<1x8x8xf32, #tpu.memory_space<vmem>>, vector<1x8x8xf32>,
    return
  }
  func.func @transform_0(%arg0: i32) -> (i32, i32, i32) {
    %c0_i32 = arith.constant 0 : i32
    %c0_i32_0 = arith.constant 0 : i32
    %c0_i32_1 = arith.constant 0 : i32
    return %arg0, %c0_i32, %c0_i32_0 : i32, i32, i32
  }
  func.func @transform_1(%arg0: i32) -> (i32, i32) {
    %c0_i32 = arith.constant 0 : i32
    %c0_i32_0 = arith.constant 0 : i32
    %c0_i32_1 = arith.constant 0 : i32
    return %c0_i32, %c0_i32_0 : i32, i32
  }
  func.func @transform_2(%arg0: i32) -> (i32, i32) {
    %c0_i32 = arith.constant 0 : i32
    %c0_i32_0 = arith.constant 0 : i32
    %c0_i32_1 = arith.constant 0 : i32
    return %c0_i32, %c0_i32_0 : i32, i32
  }
  func.func @transform_3(%arg0: i32) -> (i32, i32) {
    %c0_i32 = arith.constant 0 : i32
    %c0_i32_0 = arith.constant 0 : i32
    %c0_i32_1 = arith.constant 0 : i32
    return %c0_i32, %c0_i32_0 : i32, i32
  }
  func.func @transform_4(%arg0: i32) -> (i32, i32) {
    %c0_i32 = arith.constant 0 : i32
    %c0_i32_0 = arith.constant 0 : i32
    %c0_i32_1 = arith.constant 0 : i32
    return %c0_i32, %c0_i32_0 : i32, i32
  }
  func.func @transform_5(%arg0: i32) -> (i32, i32) {
    %c0_i32 = arith.constant 0 : i32
    %c0_i32_0 = arith.constant 0 : i32
    %c0_i32_1 = arith.constant 0 : i32
    return %c0_i32, %c0_i32_0 : i32, i32
  }
  func.func @transform_6(%arg0: i32) -> (i32, i32) {
    %c0_i32 = arith.constant 0 : i32
    %c0_i32_0 = arith.constant 0 : i32
    %c0_i32_1 = arith.constant 0 : i32
    return %c0_i32, %c0_i32_0 : i32, i32
  }
  func.func @transform_7(%arg0: i32) -> (i32, i32) {
    %c0_i32 = arith.constant 0 : i32
    %c0_i32_0 = arith.constant 0 : i32
    %c0_i32_1 = arith.constant 0 : i32
    return %c0_i32, %c0_i32_0 : i32, i32
  }
  func.func @transform_8(%arg0: i32) -> (i32, i32) {
    %c0_i32 = arith.constant 0 : i32
    %c0_i32_0 = arith.constant 0 : i32
    %c0_i32_1 = arith.constant 0 : i32
    return %c0_i32, %c0_i32_0 : i32, i32
  }
  func.func @transform_9(%arg0: i32) -> (i32, i32) {
    %c0_i32 = arith.constant 0 : i32
    %c0_i32_0 = arith.constant 0 : i32
    %c0_i32_1 = arith.constant 0 : i32
    return %c0_i32, %c0_i32_0 : i32, i32
  }
  func.func @transform_10(%arg0: i32) -> (i32, i32) {
    %c0_i32 = arith.constant 0 : i32
    %c0_i32_0 = arith.constant 0 : i32
    %c0_i32_1 = arith.constant 0 : i32
    return %c0_i32, %c0_i32_0 : i32, i32
  }
  func.func @transform_11(%arg0: i32) -> (i32, i32, i32) {
    %c0_i32 = arith.constant 0 : i32
    %c0_i32_0 = arith.constant 0 : i32
    %c0_i32_1 = arith.constant 0 : i32
    return %arg0, %c0_i32, %c0_i32_0 : i32, i32, i32
  }
}

</mosaic_0001>

<llo_original>
// kernel: gru_network_forward.1
$region0: #{gru_network_forward.1}
  #allocation0 [shape = 'u32[]', space=smem, size = 0x4, offset = 0x4, fixed_abs, tag = 'smem constant byte address 0x4 - core index']
  #allocation1 [shape = 'u32[72,128]{1,0:T(1,128)}', space=vmem, size = 0x9000, scoped, tag = 'internal scratch']
  #allocation2 [shape = 'f32[64,384]{1,0:T(8,128)}', space=vmem, size = 0x18000, scoped, tag = 'scratch operand']
  %s0 = inlined_call_operand.vmem [shape: bf16[1,64,16], index: 0, kind: input, shape index: {}]
  %s1 = inlined_call_operand.vmem [shape: bf16[16,384], index: 1, kind: input, shape index: {}]
  %s2 = inlined_call_operand.vmem [shape: f32[1,384], index: 2, kind: input, shape index: {}]
  %s3 = inlined_call_operand.vmem [shape: bf16[128,384], index: 3, kind: input, shape index: {}]
  %s4 = inlined_call_operand.vmem [shape: f32[1,128], index: 4, kind: input, shape index: {}]
  %s5 = inlined_call_operand.vmem [shape: bf16[128,128], index: 5, kind: input, shape index: {}]
  %s6 = inlined_call_operand.vmem [shape: f32[1,128], index: 6, kind: input, shape index: {}]
  %s7 = inlined_call_operand.vmem [shape: bf16[128,8], index: 7, kind: input, shape index: {}]
  %s8 = inlined_call_operand.vmem [shape: f32[1,8], index: 8, kind: input, shape index: {}]
  %s9 = inlined_call_operand.vmem [shape: f32[1,8], index: 9, kind: input, shape index: {}]
  %s10 = inlined_call_operand.vmem [shape: f32[1,8], index: 10, kind: input, shape index: {}]
  %s11 = inlined_call_operand.vmem [shape: f32[1,8,8], index: 11, kind: output, shape index: {}]
  %s12 = sld [smem:[#allocation0]]
  $region54: #{gru_network_forward.1} parent=0
    _
  %s14 = ssub.s32 1, %s12
  %s15 = scalar_select 0, %s14, %s12
  // Predicated region
  $region2: #{gru_network_forward.1} parent=0 // pred_check
    _
  $region3: #{gru_network_forward.1} parent=0 // pred_check_branch
    %17 = sbr.rel (0) target = $region5
  $region4: #{gru_network_forward.1} parent=0 // pred_region
    _
  $region5: #{gru_network_forward.1} parent=0 // pred_fallthru
    _
  // Predicated region
  $region6: #{gru_network_forward.1} parent=0 // pred_check
    _
  $region7: #{gru_network_forward.1} parent=0 // pred_check_branch
    %19 = sbr.rel (0) target = $region9
  $region8: #{gru_network_forward.1} parent=0 // pred_region
    _
  $region9: #{gru_network_forward.1} parent=0 // pred_fallthru
    _
  // Predicated region
  $region10: #{gru_network_forward.1} parent=0 // pred_check
    _
  $region11: #{gru_network_forward.1} parent=0 // pred_check_branch
    %21 = sbr.rel (0) target = $region13
  $region12: #{gru_network_forward.1} parent=0 // pred_region
    _
  $region13: #{gru_network_forward.1} parent=0 // pred_fallthru
    _
  // Predicated region
  $region14: #{gru_network_forward.1} parent=0 // pred_check
    _
  $region15: #{gru_network_forward.1} parent=0 // pred_check_branch
    %23 = sbr.rel (0) target = $region17
  $region16: #{gru_network_forward.1} parent=0 // pred_region
    _
  $region17: #{gru_network_forward.1} parent=0 // pred_fallthru
    _
  // Predicated region
  $region18: #{gru_network_forward.1} parent=0 // pred_check
    _
  $region19: #{gru_network_forward.1} parent=0 // pred_check_branch
    %25 = sbr.rel (0) target = $region21
  $region20: #{gru_network_forward.1} parent=0 // pred_region
    _
  $region21: #{gru_network_forward.1} parent=0 // pred_fallthru
    _
  // Predicated region
  $region22: #{gru_network_forward.1} parent=0 // pred_check
    _
  $region23: #{gru_network_forward.1} parent=0 // pred_check_branch
    %27 = sbr.rel (0) target = $region25
  $region24: #{gru_network_forward.1} parent=0 // pred_region
    _
  $region25: #{gru_network_forward.1} parent=0 // pred_fallthru
    _
  // Predicated region
  $region26: #{gru_network_forward.1} parent=0 // pred_check
    _
  $region27: #{gru_network_forward.1} parent=0 // pred_check_branch
    %29 = sbr.rel (0) target = $region29
  $region28: #{gru_network_forward.1} parent=0 // pred_region
    _
  $region29: #{gru_network_forward.1} parent=0 // pred_fallthru
    _
  // Predicated region
  $region30: #{gru_network_forward.1} parent=0 // pred_check
    _
  $region31: #{gru_network_forward.1} parent=0 // pred_check_branch
    %31 = sbr.rel (0) target = $region33
  $region32: #{gru_network_forward.1} parent=0 // pred_region
    _
  $region33: #{gru_network_forward.1} parent=0 // pred_fallthru
    _
  // Predicated region
  $region34: #{gru_network_forward.1} parent=0 // pred_check
    _
  $region35: #{gru_network_forward.1} parent=0 // pred_check_branch
    %33 = sbr.rel (0) target = $region37
  $region36: #{gru_network_forward.1} parent=0 // pred_region
    _
  $region37: #{gru_network_forward.1} parent=0 // pred_fallthru
    _
  // Predicated region
  $region38: #{gru_network_forward.1} parent=0 // pred_check
    _
  $region39: #{gru_network_forward.1} parent=0 // pred_check_branch
    %35 = sbr.rel (0) target = $region41
  $region40: #{gru_network_forward.1} parent=0 // pred_region
    _
  $region41: #{gru_network_forward.1} parent=0 // pred_fallthru
    _
  // Predicated region
  $region42: #{gru_network_forward.1} parent=0 // pred_check
    _
  $region43: #{gru_network_forward.1} parent=0 // pred_check_branch
    %37 = sbr.rel (0) target = $region45
  $region44: #{gru_network_forward.1} parent=0 // pred_region
    _
  $region45: #{gru_network_forward.1} parent=0 // pred_fallthru
    _
  %v39 = vld [vmem:[%s0] sm:$0xf]
  %v40 = vld [vmem:[%s0 + $0x4] sm:$0xf]
  %v41 = vld [vmem:[%s0 + $0x8] sm:$0xf]
  %v42 = vld [vmem:[%s0 + $0xc] sm:$0xf]
  %v43 = vld [vmem:[%s0 + $0x10] sm:$0xf]
  %v44 = vld [vmem:[%s0 + $0x14] sm:$0xf]
  %v45 = vld [vmem:[%s0 + $0x18] sm:$0xf]
  %v46 = vld [vmem:[%s0 + $0x1c] sm:$0xf]
  %v47 = vld [vmem:[%s1] sm:$0xff]
  %v48 = vld [vmem:[%s1 + $0x8] sm:$0xf]
  %v49 = vld [vmem:[%s1 + $0xc] sm:$0xff]
  %v50 = vld [vmem:[%s1 + $0x14] sm:$0xf]
  %v51 = vld [vmem:[%s2] sm:$0x7]
  %v53 = vperm.slane %v51, 0
  %v54 = vperm.slane %v51, 1
  %v55 = vperm.slane %v51, 2
  %v67 = vunpack.c.l.b16 %v39
  %v68 = vunpack.c.l.b16 %v40
  %v69 = vunpack.c.l.b16 %v41
  %v70 = vunpack.c.l.b16 %v42
  %v71 = vunpack.c.l.b16 %v43
  %v72 = vunpack.c.l.b16 %v44
  %v73 = vunpack.c.l.b16 %v45
  %v74 = vunpack.c.l.b16 %v46
  %v75 = vpack.c.b16 %v68, %v67
  %v76 = vpack.c.b16 %v70, %v69
  %v77 = vpack.c.b16 %v72, %v71
  %v78 = vpack.c.b16 %v74, %v73
  %v83 = vunpack.c.l.b16 %v47
  %v84 = vunpack.c.h.b16 %v47
  %v85 = vunpack.c.l.b16 %v48
  %v86 = vunpack.c.l.b16 %v49
  %v87 = vunpack.c.h.b16 %v49
  %v88 = vunpack.c.l.b16 %v50
  %v89 = vpack.c.b16 %v86, %v83
  %v90 = vpack.c.b16 %v87, %v84
  %v91 = vpack.c.b16 %v88, %v85
  %vm95 = vcmask 130048
  %v97 = vsel %vm95, %v75, 0
  %v100 = vsel %vm95, %v76, 0
  %v103 = vsel %vm95, %v77, 0
  %v106 = vsel %vm95, %v78, 0
  %108 = vmatpush.bf16.msra.mxu0 0
  %109 = vmatpush.bf16.msra.mxu0 0
  %110 = vmatpush.bf16.msra.mxu0 0
  %111 = vmatpush.bf16.msra.mxu0 0
  %112 = vmatpush.bf16.msra.mxu0 0
  %113 = vmatpush.bf16.msra.mxu0 0
  %114 = vmatpush.bf16.msra.mxu0 0
  %115 = vmatpush.bf16.msra.mxu0 %v89
  %116 = vmatmul.bf16.gmra.mxu0 %v97
  %v117 = vpop.f32.mrf.mxu0
  %v118 = vadd.f32 %v53, %v117
  %v119 = vpop.f32.mrf.mxu0
  %v120 = vadd.f32 %v53, %v119
  %121 = vmatmul.bf16.gmra.mxu0 %v100
  %v122 = vpop.f32.mrf.mxu0
  %v123 = vadd.f32 %v53, %v122
  %v124 = vpop.f32.mrf.mxu0
  %v125 = vadd.f32 %v53, %v124
  %126 = vmatmul.bf16.gmra.mxu0 %v103
  %v127 = vpop.f32.mrf.mxu0
  %v128 = vadd.f32 %v53, %v127
  %v129 = vpop.f32.mrf.mxu0
  %v130 = vadd.f32 %v53, %v129
  %131 = vmatmul.bf16.gmra.mxu0 %v106
  %v132 = vpop.f32.mrf.mxu0
  %v133 = vadd.f32 %v53, %v132
  %v134 = vpop.f32.mrf.mxu0
  %v135 = vadd.f32 %v53, %v134
  %136 = vdwg.mxu0
  %137 = vmatpush.bf16.msra.mxu0 0
  %138 = vmatpush.bf16.msra.mxu0 0
  %139 = vmatpush.bf16.msra.mxu0 0
  %140 = vmatpush.bf16.msra.mxu0 0
  %141 = vmatpush.bf16.msra.mxu0 0
  %142 = vmatpush.bf16.msra.mxu0 0
  %143 = vmatpush.bf16.msra.mxu0 0
  %144 = vmatpush.bf16.msra.mxu0 %v90
  %145 = vmatmul.bf16.gmra.mxu0 %v97
  %v146 = vpop.f32.mrf.mxu0
  %v147 = vadd.f32 %v54, %v146
  %v148 = vpop.f32.mrf.mxu0
  %v149 = vadd.f32 %v54, %v148
  %150 = vmatmul.bf16.gmra.mxu0 %v100
  %v151 = vpop.f32.mrf.mxu0
  %v152 = vadd.f32 %v54, %v151
  %v153 = vpop.f32.mrf.mxu0
  %v154 = vadd.f32 %v54, %v153
  %155 = vmatmul.bf16.gmra.mxu0 %v103
  %v156 = vpop.f32.mrf.mxu0
  %v157 = vadd.f32 %v54, %v156
  %v158 = vpop.f32.mrf.mxu0
  %v159 = vadd.f32 %v54, %v158
  %160 = vmatmul.bf16.gmra.mxu0 %v106
  %v161 = vpop.f32.mrf.mxu0
  %v162 = vadd.f32 %v54, %v161
  %v163 = vpop.f32.mrf.mxu0
  %v164 = vadd.f32 %v54, %v163
  %165 = vdwg.mxu0
  %166 = vmatpush.bf16.msra.mxu0 0
  %167 = vmatpush.bf16.msra.mxu0 0
  %168 = vmatpush.bf16.msra.mxu0 0
  %169 = vmatpush.bf16.msra.mxu0 0
  %170 = vmatpush.bf16.msra.mxu0 0
  %171 = vmatpush.bf16.msra.mxu0 0
  %172 = vmatpush.bf16.msra.mxu0 0
  %173 = vmatpush.bf16.msra.mxu0 %v91
  %174 = vmatmul.bf16.gmra.mxu0 %v97
  %v175 = vpop.f32.mrf.mxu0
  %v176 = vadd.f32 %v55, %v175
  %v177 = vpop.f32.mrf.mxu0
  %v178 = vadd.f32 %v55, %v177
  %179 = vmatmul.bf16.gmra.mxu0 %v100
  %v180 = vpop.f32.mrf.mxu0
  %v181 = vadd.f32 %v55, %v180
  %v182 = vpop.f32.mrf.mxu0
  %v183 = vadd.f32 %v55, %v182
  %184 = vmatmul.bf16.gmra.mxu0 %v103
  %v185 = vpop.f32.mrf.mxu0
  %v186 = vadd.f32 %v55, %v185
  %v187 = vpop.f32.mrf.mxu0
  %v188 = vadd.f32 %v55, %v187
  %189 = vmatmul.bf16.gmra.mxu0 %v106
  %v190 = vpop.f32.mrf.mxu0
  %v191 = vadd.f32 %v55, %v190
  %v192 = vpop.f32.mrf.mxu0
  %v193 = vadd.f32 %v55, %v192
  %194 = vdwg.mxu0
  %195 = vst [vmem:[#allocation2] sm:$0xff] %v118
  %196 = vst [vmem:[#allocation2 + $0x8] sm:$0xff] %v147
  %197 = vst [vmem:[#allocation2 + $0x10] sm:$0xff] %v176
  %198 = vst [vmem:[#allocation2 + $0x18] sm:$0xff] %v120
  %199 = vst [vmem:[#allocation2 + $0x20] sm:$0xff] %v149
  %200 = vst [vmem:[#allocation2 + $0x28] sm:$0xff] %v178
  %201 = vst [vmem:[#allocation2 + $0x30] sm:$0xff] %v123
  %202 = vst [vmem:[#allocation2 + $0x38] sm:$0xff] %v152
  %203 = vst [vmem:[#allocation2 + $0x40] sm:$0xff] %v181
  %204 = vst [vmem:[#allocation2 + $0x48] sm:$0xff] %v125
  %205 = vst [vmem:[#allocation2 + $0x50] sm:$0xff] %v154
  %206 = vst [vmem:[#allocation2 + $0x58] sm:$0xff] %v183
  %207 = vst [vmem:[#allocation2 + $0x60] sm:$0xff] %v128
  %208 = vst [vmem:[#allocation2 + $0x68] sm:$0xff] %v157
  %209 = vst [vmem:[#allocation2 + $0x70] sm:$0xff] %v186
  %210 = vst [vmem:[#allocation2 + $0x78] sm:$0xff] %v130
  %211 = vst [vmem:[#allocation2 + $0x80] sm:$0xff] %v159
  %212 = vst [vmem:[#allocation2 + $0x88] sm:$0xff] %v188
  %213 = vst [vmem:[#allocation2 + $0x90] sm:$0xff] %v133
  %214 = vst [vmem:[#allocation2 + $0x98] sm:$0xff] %v162
  %215 = vst [vmem:[#allocation2 + $0xa0] sm:$0xff] %v191
  %216 = vst [vmem:[#allocation2 + $0xa8] sm:$0xff] %v135
  %217 = vst [vmem:[#allocation2 + $0xb0] sm:$0xff] %v164
  %218 = vst [vmem:[#allocation2 + $0xb8] sm:$0xff] %v193
  %v219 = vld [vmem:[%s3] sm:$0xff]
  %v220 = vld [vmem:[%s3 + $0x8] sm:$0xf]
  %v221 = vld [vmem:[%s3 + $0xc] sm:$0xff]
  %v222 = vld [vmem:[%s3 + $0x14] sm:$0xf]
  %v223 = vld [vmem:[%s3 + $0x18] sm:$0xff]
  %v224 = vld [vmem:[%s3 + $0x20] sm:$0xf]
  %v225 = vld [vmem:[%s3 + $0x24] sm:$0xff]
  %v226 = vld [vmem:[%s3 + $0x2c] sm:$0xf]
  %v227 = vld [vmem:[%s3 + $0x30] sm:$0xff]
  %v228 = vld [vmem:[%s3 + $0x38] sm:$0xf]
  %v229 = vld [vmem:[%s3 + $0x3c] sm:$0xff]
  %v230 = vld [vmem:[%s3 + $0x44] sm:$0xf]
  %v231 = vld [vmem:[%s3 + $0x48] sm:$0xff]
  %v232 = vld [vmem:[%s3 + $0x50] sm:$0xf]
  %v233 = vld [vmem:[%s3 + $0x54] sm:$0xff]
  %v234 = vld [vmem:[%s3 + $0x5c] sm:$0xf]
  %v235 = vld [vmem:[%s3 + $0x60] sm:$0xff]
  %v236 = vld [vmem:[%s3 + $0x68] sm:$0xf]
  %v237 = vld [vmem:[%s3 + $0x6c] sm:$0xff]
  %v238 = vld [vmem:[%s3 + $0x74] sm:$0xf]
  %v239 = vld [vmem:[%s3 + $0x78] sm:$0xff]
  %v240 = vld [vmem:[%s3 + $0x80] sm:$0xf]
  %v241 = vld [vmem:[%s3 + $0x84] sm:$0xff]
  %v242 = vld [vmem:[%s3 + $0x8c] sm:$0xf]
  %v243 = vld [vmem:[%s3 + $0x90] sm:$0xff]
  %v244 = vld [vmem:[%s3 + $0x98] sm:$0xf]
  %v245 = vld [vmem:[%s3 + $0x9c] sm:$0xff]
  %v246 = vld [vmem:[%s3 + $0xa4] sm:$0xf]
  %v247 = vld [vmem:[%s3 + $0xa8] sm:$0xff]
  %v248 = vld [vmem:[%s3 + $0xb0] sm:$0xf]
  %v249 = vld [vmem:[%s3 + $0xb4] sm:$0xff]
  %v250 = vld [vmem:[%s3 + $0xbc] sm:$0xf]
  %v251 = vld [vmem:[%s4] sm:$0x1]
  %v252 = vld [vmem:[#allocation2] sm:$0xff]
  %v253 = vld [vmem:[#allocation2 + $0x8] sm:$0xff]
  %v254 = vld [vmem:[#allocation2 + $0x10] sm:$0xff]
  %v255 = vxor.u32 %v252, 2147483648
  %v256 = vxor.u32 %v253, 2147483648
  %v257 = vmul.f32 %v255, 1.442695
  %v258 = vpow.pop %v257
  %v259 = vmul.f32 %v256, 1.442695
  %v260 = vpow.pop %v259
  %v261 = vadd.f32 %v258, 1.0
  %v262 = vadd.f32 %v260, 1.0
  %v263 = vrcp.pop %v261
  %v264 = vmul.f32 %v261, %v263
  %v265 = vsub.f32 1.0, %v264
  %v266 = vmul.f32 %v263, %v265
  %v267 = vadd.f32 %v263, %v266
  %vm268 = vweird.f32 %v261
  %vm269 = vweird.f32 %v263
  %vm270 = vmor %vm268, %vm269
  %v271 = vsel %vm270, %v263, %v267
  %v272 = vand.u32 2147483647, %v261
  %vm273 = vcmp.eq.f32.partialorder %v272, 8.507059e+37
  %v274 = vand.u32 %v261, 2147483648
  %v275 = vor.u32 1.1754944e-38, %v274
  %v276 = vsel %vm273, %v275, %v271
  %v277 = vmul.f32 1.0, %v276
  %v278 = vrcp.pop %v262
  %v279 = vmul.f32 %v262, %v278
  %v280 = vsub.f32 1.0, %v279
  %v281 = vmul.f32 %v278, %v280
  %v282 = vadd.f32 %v278, %v281
  %vm283 = vweird.f32 %v262
  %vm284 = vweird.f32 %v278
  %vm285 = vmor %vm283, %vm284
  %v286 = vsel %vm285, %v278, %v282
  %v287 = vand.u32 2147483647, %v262
  %vm288 = vcmp.eq.f32.partialorder %v287, 8.507059e+37
  %v289 = vand.u32 %v262, 2147483648
  %v290 = vor.u32 1.1754944e-38, %v289
  %v291 = vsel %vm288, %v290, %v286
  %v292 = vmul.f32 1.0, %v291
  %v294 = vperm.slane %v251, 0
  %v296 = vmul.f32 %v277, %v294
  %v297 = vadd.f32 %v254, %v296
  %v298 = vtanh.pop %v297
  %v299 = vmul.f32 %v292, %v298
  %v300 = vsub.f32 %v298, %v299
  %s301 = smul.u32 1, 3
  %s302 = smul.addr %s301, 8
  %s303 = scalar_lea.vmem [#allocation2], %s302
  %v304 = vld [vmem:[%s303] sm:$0xff]
  %v305 = vld [vmem:[%s303 + $0x8] sm:$0xff]
  %v306 = vld [vmem:[%s303 + $0x10] sm:$0xff]
  %v307 = vpack.c.bf16 %v300, %v300
  %v340 = vunpack.c.l.b16 %v219
  %v341 = vunpack.c.h.b16 %v219
  %v342 = vunpack.c.l.b16 %v220
  %v343 = vunpack.c.l.b16 %v221
  %v344 = vunpack.c.h.b16 %v221
  %v345 = vunpack.c.l.b16 %v222
  %v346 = vunpack.c.l.b16 %v223
  %v347 = vunpack.c.h.b16 %v223
  %v348 = vunpack.c.l.b16 %v224
  %v349 = vunpack.c.l.b16 %v225
  %v350 = vunpack.c.h.b16 %v225
  %v351 = vunpack.c.l.b16 %v226
  %v352 = vunpack.c.l.b16 %v227
  %v353 = vunpack.c.h.b16 %v227
  %v354 = vunpack.c.l.b16 %v228
  %v355 = vunpack.c.l.b16 %v229
  %v356 = vunpack.c.h.b16 %v229
  %v357 = vunpack.c.l.b16 %v230
  %v358 = vunpack.c.l.b16 %v231
  %v359 = vunpack.c.h.b16 %v231
  %v360 = vunpack.c.l.b16 %v232
  %v361 = vunpack.c.l.b16 %v233
  %v362 = vunpack.c.h.b16 %v233
  %v363 = vunpack.c.l.b16 %v234
  %v364 = vunpack.c.l.b16 %v235
  %v365 = vunpack.c.h.b16 %v235
  %v366 = vunpack.c.l.b16 %v236
  %v367 = vunpack.c.l.b16 %v237
  %v368 = vunpack.c.h.b16 %v237
  %v369 = vunpack.c.l.b16 %v238
  %v370 = vunpack.c.l.b16 %v239
  %v371 = vunpack.c.h.b16 %v239
  %v372 = vunpack.c.l.b16 %v240
  %v373 = vunpack.c.l.b16 %v241
  %v374 = vunpack.c.h.b16 %v241
  %v375 = vunpack.c.l.b16 %v242
  %v376 = vunpack.c.l.b16 %v243
  %v377 = vunpack.c.h.b16 %v243
  %v378 = vunpack.c.l.b16 %v244
  %v379 = vunpack.c.l.b16 %v245
  %v380 = vunpack.c.h.b16 %v245
  %v381 = vunpack.c.l.b16 %v246
  %v382 = vunpack.c.l.b16 %v247
  %v383 = vunpack.c.h.b16 %v247
  %v384 = vunpack.c.l.b16 %v248
  %v385 = vunpack.c.l.b16 %v249
  %v386 = vunpack.c.h.b16 %v249
  %v387 = vunpack.c.l.b16 %v250
  %v388 = vpack.c.b16 %v343, %v340
  %v389 = vpack.c.b16 %v344, %v341
  %v390 = vpack.c.b16 %v345, %v342
  %v391 = vpack.c.b16 %v349, %v346
  %v392 = vpack.c.b16 %v350, %v347
  %v393 = vpack.c.b16 %v351, %v348
  %v394 = vpack.c.b16 %v355, %v352
  %v395 = vpack.c.b16 %v356, %v353
  %v396 = vpack.c.b16 %v357, %v354
  %v397 = vpack.c.b16 %v361, %v358
  %v398 = vpack.c.b16 %v362, %v359
  %v399 = vpack.c.b16 %v363, %v360
  %v400 = vpack.c.b16 %v367, %v364
  %v401 = vpack.c.b16 %v368, %v365
  %v402 = vpack.c.b16 %v369, %v366
  %v403 = vpack.c.b16 %v373, %v370
  %v404 = vpack.c.b16 %v374, %v371
  %v405 = vpack.c.b16 %v375, %v372
  %v406 = vpack.c.b16 %v379, %v376
  %v407 = vpack.c.b16 %v380, %v377
  %v408 = vpack.c.b16 %v381, %v378
  %v409 = vpack.c.b16 %v385, %v382
  %v410 = vpack.c.b16 %v386, %v383
  %v411 = vpack.c.b16 %v387, %v384
  %436 = vmatpush.bf16.msra.mxu0 %v409
  %437 = vmatpush.bf16.msra.mxu0 %v406
  %438 = vmatpush.bf16.msra.mxu0 %v403
  %439 = vmatpush.bf16.msra.mxu0 %v400
  %440 = vmatpush.bf16.msra.mxu0 %v397
  %441 = vmatpush.bf16.msra.mxu0 %v394
  %442 = vmatpush.bf16.msra.mxu0 %v391
  %443 = vmatpush.bf16.msra.mxu0 %v388
  %444 = vmatmul.bf16.gmra.mxu0 %v307
  %v445 = vpop.f32.mrf.mxu0
  %v446 = vadd.f32 0.0, %v445
  %v447 = vpop.f32.mrf.mxu0
  %448 = vdwg.mxu0
  %449 = vmatpush.bf16.msra.mxu0 %v410
  %450 = vmatpush.bf16.msra.mxu0 %v407
  %451 = vmatpush.bf16.msra.mxu0 %v404
  %452 = vmatpush.bf16.msra.mxu0 %v401
  %453 = vmatpush.bf16.msra.mxu0 %v398
  %454 = vmatpush.bf16.msra.mxu0 %v395
  %455 = vmatpush.bf16.msra.mxu0 %v392
  %456 = vmatpush.bf16.msra.mxu0 %v389
  %457 = vmatmul.bf16.gmra.mxu0 %v307
  %v458 = vpop.f32.mrf.mxu0
  %v459 = vadd.f32 0.0, %v458
  %v460 = vpop.f32.mrf.mxu0
  %461 = vdwg.mxu0
  %462 = vmatpush.bf16.msra.mxu0 %v411
  %463 = vmatpush.bf16.msra.mxu0 %v408
  %464 = vmatpush.bf16.msra.mxu0 %v405
  %465 = vmatpush.bf16.msra.mxu0 %v402
  %466 = vmatpush.bf16.msra.mxu0 %v399
  %467 = vmatpush.bf16.msra.mxu0 %v396
  %468 = vmatpush.bf16.msra.mxu0 %v393
  %469 = vmatpush.bf16.msra.mxu0 %v390
  %470 = vmatmul.bf16.gmra.mxu0 %v307
  %v471 = vpop.f32.mrf.mxu0
  %v472 = vadd.f32 0.0, %v471
  %v473 = vpop.f32.mrf.mxu0
  %474 = vdwg.mxu0
  %v475 = vadd.f32 %v304, %v446
  %v476 = vadd.f32 %v305, %v459
  %v477 = vxor.u32 %v475, 2147483648
  %v478 = vxor.u32 %v476, 2147483648
  %v479 = vmul.f32 %v477, 1.442695
  %v480 = vpow.pop %v479
  %v481 = vmul.f32 %v478, 1.442695
  %v482 = vpow.pop %v481
  %v483 = vadd.f32 %v480, 1.0
  %v484 = vadd.f32 %v482, 1.0
  %v485 = vrcp.pop %v483
  %v486 = vmul.f32 %v483, %v485
  %v487 = vsub.f32 1.0, %v486
  %v488 = vmul.f32 %v485, %v487
  %v489 = vadd.f32 %v485, %v488
  %vm490 = vweird.f32 %v483
  %vm491 = vweird.f32 %v485
  %vm492 = vmor %vm490, %vm491
  %v493 = vsel %vm492, %v485, %v489
  %v494 = vand.u32 2147483647, %v483
  %vm495 = vcmp.eq.f32.partialorder %v494, 8.507059e+37
  %v496 = vand.u32 %v483, 2147483648
  %v497 = vor.u32 1.1754944e-38, %v496
  %v498 = vsel %vm495, %v497, %v493
  %v499 = vmul.f32 1.0, %v498
  %v500 = vrcp.pop %v484
  %v501 = vmul.f32 %v484, %v500
  %v502 = vsub.f32 1.0, %v501
  %v503 = vmul.f32 %v500, %v502
  %v504 = vadd.f32 %v500, %v503
  %vm505 = vweird.f32 %v484
  %vm506 = vweird.f32 %v500
  %vm507 = vmor %vm505, %vm506
  %v508 = vsel %vm507, %v500, %v504
  %v509 = vand.u32 2147483647, %v484
  %vm510 = vcmp.eq.f32.partialorder %v509, 8.507059e+37
  %v511 = vand.u32 %v484, 2147483648
  %v512 = vor.u32 1.1754944e-38, %v511
  %v513 = vsel %vm510, %v512, %v508
  %v514 = vmul.f32 1.0, %v513
  %v515 = vadd.f32 %v472, %v294
  %v516 = vmul.f32 %v499, %v515
  %v517 = vadd.f32 %v306, %v516
  %v518 = vtanh.pop %v517
  %v519 = vsub.f32 %v300, %v518
  %v520 = vmul.f32 %v514, %v519
  %v521 = vadd.f32 %v518, %v520
  %s522 = smul.u32 2, 3
  %s523 = smul.addr %s522, 8
  %s524 = scalar_lea.vmem [#allocation2], %s523
  %v525 = vld [vmem:[%s524] sm:$0xff]
  %v526 = vld [vmem:[%s524 + $0x8] sm:$0xff]
  %v527 = vld [vmem:[%s524 + $0x10] sm:$0xff]
  %v528 = vpack.c.bf16 %v521, %v521
  %529 = vmatpush.bf16.msra.mxu0 %v409
  %530 = vmatpush.bf16.msra.mxu0 %v406
  %531 = vmatpush.bf16.msra.mxu0 %v403
  %532 = vmatpush.bf16.msra.mxu0 %v400
  %533 = vmatpush.bf16.msra.mxu0 %v397
  %534 = vmatpush.bf16.msra.mxu0 %v394
  %535 = vmatpush.bf16.msra.mxu0 %v391
  %536 = vmatpush.bf16.msra.mxu0 %v388
  %537 = vmatmul.bf16.gmra.mxu0 %v528
  %v538 = vpop.f32.mrf.mxu0
  %v539 = vadd.f32 0.0, %v538
  %v540 = vpop.f32.mrf.mxu0
  %541 = vdwg.mxu0
  %542 = vmatpush.bf16.msra.mxu0 %v410
  %543 = vmatpush.bf16.msra.mxu0 %v407
  %544 = vmatpush.bf16.msra.mxu0 %v404
  %545 = vmatpush.bf16.msra.mxu0 %v401
  %546 = vmatpush.bf16.msra.mxu0 %v398
  %547 = vmatpush.bf16.msra.mxu0 %v395
  %548 = vmatpush.bf16.msra.mxu0 %v392
  %549 = vmatpush.bf16.msra.mxu0 %v389
  %550 = vmatmul.bf16.gmra.mxu0 %v528
  %v551 = vpop.f32.mrf.mxu0
  %v552 = vadd.f32 0.0, %v551
  %v553 = vpop.f32.mrf.mxu0
  %554 = vdwg.mxu0
  %555 = vmatpush.bf16.msra.mxu0 %v411
  %556 = vmatpush.bf16.msra.mxu0 %v408
  %557 = vmatpush.bf16.msra.mxu0 %v405
  %558 = vmatpush.bf16.msra.mxu0 %v402
  %559 = vmatpush.bf16.msra.mxu0 %v399
  %560 = vmatpush.bf16.msra.mxu0 %v396
  %561 = vmatpush.bf16.msra.mxu0 %v393
  %562 = vmatpush.bf16.msra.mxu0 %v390
  %563 = vmatmul.bf16.gmra.mxu0 %v528
  %v564 = vpop.f32.mrf.mxu0
  %v565 = vadd.f32 0.0, %v564
  %v566 = vpop.f32.mrf.mxu0
  %567 = vdwg.mxu0
  %v568 = vadd.f32 %v525, %v539
  %v569 = vadd.f32 %v526, %v552
  %v570 = vxor.u32 %v568, 2147483648
  %v571 = vxor.u32 %v569, 2147483648
  %v572 = vmul.f32 %v570, 1.442695
  %v573 = vpow.pop %v572
  %v574 = vmul.f32 %v571, 1.442695
  %v575 = vpow.pop %v574
  %v576 = vadd.f32 %v573, 1.0
  %v577 = vadd.f32 %v575, 1.0
  %v578 = vrcp.pop %v576
  %v579 = vmul.f32 %v576, %v578
  %v580 = vsub.f32 1.0, %v579
  %v581 = vmul.f32 %v578, %v580
  %v582 = vadd.f32 %v578, %v581
  %vm583 = vweird.f32 %v576
  %vm584 = vweird.f32 %v578
  %vm585 = vmor %vm583, %vm584
  %v586 = vsel %vm585, %v578, %v582
  %v587 = vand.u32 2147483647, %v576
  %vm588 = vcmp.eq.f32.partialorder %v587, 8.507059e+37
  %v589 = vand.u32 %v576, 2147483648
  %v590 = vor.u32 1.1754944e-38, %v589
  %v591 = vsel %vm588, %v590, %v586
  %v592 = vmul.f32 1.0, %v591
  %v593 = vrcp.pop %v577
  %v594 = vmul.f32 %v577, %v593
  %v595 = vsub.f32 1.0, %v594
  %v596 = vmul.f32 %v593, %v595
  %v597 = vadd.f32 %v593, %v596
  %vm598 = vweird.f32 %v577
  %vm599 = vweird.f32 %v593
  %vm600 = vmor %vm598, %vm599
  %v601 = vsel %vm600, %v593, %v597
  %v602 = vand.u32 2147483647, %v577
  %vm603 = vcmp.eq.f32.partialorder %v602, 8.507059e+37
  %v604 = vand.u32 %v577, 2147483648
  %v605 = vor.u32 1.1754944e-38, %v604
  %v606 = vsel %vm603, %v605, %v601
  %v607 = vmul.f32 1.0, %v606
  %v608 = vadd.f32 %v565, %v294
  %v609 = vmul.f32 %v592, %v608
  %v610 = vadd.f32 %v527, %v609
  %v611 = vtanh.pop %v610
  %v612 = vsub.f32 %v521, %v611
  %v613 = vmul.f32 %v607, %v612
  %v614 = vadd.f32 %v611, %v613
  %s615 = smul.u32 3, 3
  %s616 = smul.addr %s615, 8
  %s617 = scalar_lea.vmem [#allocation2], %s616
  %v618 = vld [vmem:[%s617] sm:$0xff]
  %v619 = vld [vmem:[%s617 + $0x8] sm:$0xff]
  %v620 = vld [vmem:[%s617 + $0x10] sm:$0xff]
  %v621 = vpack.c.bf16 %v614, %v614
  %622 = vmatpush.bf16.msra.mxu0 %v409
  %623 = vmatpush.bf16.msra.mxu0 %v406
  %624 = vmatpush.bf16.msra.mxu0 %v403
  %625 = vmatpush.bf16.msra.mxu0 %v400
  %626 = vmatpush.bf16.msra.mxu0 %v397
  %627 = vmatpush.bf16.msra.mxu0 %v394
  %628 = vmatpush.bf16.msra.mxu0 %v391
  %629 = vmatpush.bf16.msra.mxu0 %v388
  %630 = vmatmul.bf16.gmra.mxu0 %v621
  %v631 = vpop.f32.mrf.mxu0
  %v632 = vadd.f32 0.0, %v631
  %v633 = vpop.f32.mrf.mxu0
  %634 = vdwg.mxu0
  %635 = vmatpush.bf16.msra.mxu0 %v410
  %636 = vmatpush.bf16.msra.mxu0 %v407
  %637 = vmatpush.bf16.msra.mxu0 %v404
  %638 = vmatpush.bf16.msra.mxu0 %v401
  %639 = vmatpush.bf16.msra.mxu0 %v398
  %640 = vmatpush.bf16.msra.mxu0 %v395
  %641 = vmatpush.bf16.msra.mxu0 %v392
  %642 = vmatpush.bf16.msra.mxu0 %v389
  %643 = vmatmul.bf16.gmra.mxu0 %v621
  %v644 = vpop.f32.mrf.mxu0
  %v645 = vadd.f32 0.0, %v644
  %v646 = vpop.f32.mrf.mxu0
  %647 = vdwg.mxu0
  %648 = vmatpush.bf16.msra.mxu0 %v411
  %649 = vmatpush.bf16.msra.mxu0 %v408
  %650 = vmatpush.bf16.msra.mxu0 %v405
  %651 = vmatpush.bf16.msra.mxu0 %v402
  %652 = vmatpush.bf16.msra.mxu0 %v399
  %653 = vmatpush.bf16.msra.mxu0 %v396
  %654 = vmatpush.bf16.msra.mxu0 %v393
  %655 = vmatpush.bf16.msra.mxu0 %v390
  %656 = vmatmul.bf16.gmra.mxu0 %v621
  %v657 = vpop.f32.mrf.mxu0
  %v658 = vadd.f32 0.0, %v657
  %v659 = vpop.f32.mrf.mxu0
  %660 = vdwg.mxu0
  %v661 = vadd.f32 %v618, %v632
  %v662 = vadd.f32 %v619, %v645
  %v663 = vxor.u32 %v661, 2147483648
  %v664 = vxor.u32 %v662, 2147483648
  %v665 = vmul.f32 %v663, 1.442695
  %v666 = vpow.pop %v665
  %v667 = vmul.f32 %v664, 1.442695
  %v668 = vpow.pop %v667
  %v669 = vadd.f32 %v666, 1.0
  %v670 = vadd.f32 %v668, 1.0
  %v671 = vrcp.pop %v669
  %v672 = vmul.f32 %v669, %v671
  %v673 = vsub.f32 1.0, %v672
  %v674 = vmul.f32 %v671, %v673
  %v675 = vadd.f32 %v671, %v674
  %vm676 = vweird.f32 %v669
  %vm677 = vweird.f32 %v671
  %vm678 = vmor %vm676, %vm677
  %v679 = vsel %vm678, %v671, %v675
  %v680 = vand.u32 2147483647, %v669
  %vm681 = vcmp.eq.f32.partialorder %v680, 8.507059e+37
  %v682 = vand.u32 %v669, 2147483648
  %v683 = vor.u32 1.1754944e-38, %v682
  %v684 = vsel %vm681, %v683, %v679
  %v685 = vmul.f32 1.0, %v684
  %v686 = vrcp.pop %v670
  %v687 = vmul.f32 %v670, %v686
  %v688 = vsub.f32 1.0, %v687
  %v689 = vmul.f32 %v686, %v688
  %v690 = vadd.f32 %v686, %v689
  %vm691 = vweird.f32 %v670
  %vm692 = vweird.f32 %v686
  %vm693 = vmor %vm691, %vm692
  %v694 = vsel %vm693, %v686, %v690
  %v695 = vand.u32 2147483647, %v670
  %vm696 = vcmp.eq.f32.partialorder %v695, 8.507059e+37
  %v697 = vand.u32 %v670, 2147483648
  %v698 = vor.u32 1.1754944e-38, %v697
  %v699 = vsel %vm696, %v698, %v694
  %v700 = vmul.f32 1.0, %v699
  %v701 = vadd.f32 %v658, %v294
  %v702 = vmul.f32 %v685, %v701
  %v703 = vadd.f32 %v620, %v702
  %v704 = vtanh.pop %v703
  %v705 = vsub.f32 %v614, %v704
  %v706 = vmul.f32 %v700, %v705
  %v707 = vadd.f32 %v704, %v706
  %s708 = smul.u32 4, 3
  %s709 = smul.addr %s708, 8
  %s710 = scalar_lea.vmem [#allocation2], %s709
  %v711 = vld [vmem:[%s710] sm:$0xff]
  %v712 = vld [vmem:[%s710 + $0x8] sm:$0xff]
  %v713 = vld [vmem:[%s710 + $0x10] sm:$0xff]
  %v714 = vpack.c.bf16 %v707, %v707
  %715 = vmatpush.bf16.msra.mxu0 %v409
  %716 = vmatpush.bf16.msra.mxu0 %v406
  %717 = vmatpush.bf16.msra.mxu0 %v403
  %718 = vmatpush.bf16.msra.mxu0 %v400
  %719 = vmatpush.bf16.msra.mxu0 %v397
  %720 = vmatpush.bf16.msra.mxu0 %v394
  %721 = vmatpush.bf16.msra.mxu0 %v391
  %722 = vmatpush.bf16.msra.mxu0 %v388
  %723 = vmatmul.bf16.gmra.mxu0 %v714
  %v724 = vpop.f32.mrf.mxu0
  %v725 = vadd.f32 0.0, %v724
  %v726 = vpop.f32.mrf.mxu0
  %727 = vdwg.mxu0
  %728 = vmatpush.bf16.msra.mxu0 %v410
  %729 = vmatpush.bf16.msra.mxu0 %v407
  %730 = vmatpush.bf16.msra.mxu0 %v404
  %731 = vmatpush.bf16.msra.mxu0 %v401
  %732 = vmatpush.bf16.msra.mxu0 %v398
  %733 = vmatpush.bf16.msra.mxu0 %v395
  %734 = vmatpush.bf16.msra.mxu0 %v392
  %735 = vmatpush.bf16.msra.mxu0 %v389
  %736 = vmatmul.bf16.gmra.mxu0 %v714
  %v737 = vpop.f32.mrf.mxu0
  %v738 = vadd.f32 0.0, %v737
  %v739 = vpop.f32.mrf.mxu0
  %740 = vdwg.mxu0
  %741 = vmatpush.bf16.msra.mxu0 %v411
  %742 = vmatpush.bf16.msra.mxu0 %v408
  %743 = vmatpush.bf16.msra.mxu0 %v405
  %744 = vmatpush.bf16.msra.mxu0 %v402
  %745 = vmatpush.bf16.msra.mxu0 %v399
  %746 = vmatpush.bf16.msra.mxu0 %v396
  %747 = vmatpush.bf16.msra.mxu0 %v393
  %748 = vmatpush.bf16.msra.mxu0 %v390
  %749 = vmatmul.bf16.gmra.mxu0 %v714
  %v750 = vpop.f32.mrf.mxu0
  %v751 = vadd.f32 0.0, %v750
  %v752 = vpop.f32.mrf.mxu0
  %753 = vdwg.mxu0
  %v754 = vadd.f32 %v711, %v725
  %v755 = vadd.f32 %v712, %v738
  %v756 = vxor.u32 %v754, 2147483648
  %v757 = vxor.u32 %v755, 2147483648
  %v758 = vmul.f32 %v756, 1.442695
  %v759 = vpow.pop %v758
  %v760 = vmul.f32 %v757, 1.442695
  %v761 = vpow.pop %v760
  %v762 = vadd.f32 %v759, 1.0
  %v763 = vadd.f32 %v761, 1.0
  %v764 = vrcp.pop %v762
  %v765 = vmul.f32 %v762, %v764
  %v766 = vsub.f32 1.0, %v765
  %v767 = vmul.f32 %v764, %v766
  %v768 = vadd.f32 %v764, %v767
  %vm769 = vweird.f32 %v762
  %vm770 = vweird.f32 %v764
  %vm771 = vmor %vm769, %vm770
  %v772 = vsel %vm771, %v764, %v768
  %v773 = vand.u32 2147483647, %v762
  %vm774 = vcmp.eq.f32.partialorder %v773, 8.507059e+37
  %v775 = vand.u32 %v762, 2147483648
  %v776 = vor.u32 1.1754944e-38, %v775
  %v777 = vsel %vm774, %v776, %v772
  %v778 = vmul.f32 1.0, %v777
  %v779 = vrcp.pop %v763
  %v780 = vmul.f32 %v763, %v779
  %v781 = vsub.f32 1.0, %v780
  %v782 = vmul.f32 %v779, %v781
  %v783 = vadd.f32 %v779, %v782
  %vm784 = vweird.f32 %v763
  %vm785 = vweird.f32 %v779
  %vm786 = vmor %vm784, %vm785
  %v787 = vsel %vm786, %v779, %v783
  %v788 = vand.u32 2147483647, %v763
  %vm789 = vcmp.eq.f32.partialorder %v788, 8.507059e+37
  %v790 = vand.u32 %v763, 2147483648
  %v791 = vor.u32 1.1754944e-38, %v790
  %v792 = vsel %vm789, %v791, %v787
  %v793 = vmul.f32 1.0, %v792
  %v794 = vadd.f32 %v751, %v294
  %v795 = vmul.f32 %v778, %v794
  %v796 = vadd.f32 %v713, %v795
  %v797 = vtanh.pop %v796
  %v798 = vsub.f32 %v707, %v797
  %v799 = vmul.f32 %v793, %v798
  %v800 = vadd.f32 %v797, %v799
  %s801 = smul.u32 5, 3
  %s802 = smul.addr %s801, 8
  %s803 = scalar_lea.vmem [#allocation2], %s802
  %v804 = vld [vmem:[%s803] sm:$0xff]
  %v805 = vld [vmem:[%s803 + $0x8] sm:$0xff]
  %v806 = vld [vmem:[%s803 + $0x10] sm:$0xff]
  %v807 = vpack.c.bf16 %v800, %v800
  %808 = vmatpush.bf16.msra.mxu0 %v409
  %809 = vmatpush.bf16.msra.mxu0 %v406
  %810 = vmatpush.bf16.msra.mxu0 %v403
  %811 = vmatpush.bf16.msra.mxu0 %v400
  %812 = vmatpush.bf16.msra.mxu0 %v397
  %813 = vmatpush.bf16.msra.mxu0 %v394
  %814 = vmatpush.bf16.msra.mxu0 %v391
  %815 = vmatpush.bf16.msra.mxu0 %v388
  %816 = vmatmul.bf16.gmra.mxu0 %v807
  %v817 = vpop.f32.mrf.mxu0
  %v818 = vadd.f32 0.0, %v817
  %v819 = vpop.f32.mrf.mxu0
  %820 = vdwg.mxu0
  %821 = vmatpush.bf16.msra.mxu0 %v410
  %822 = vmatpush.bf16.msra.mxu0 %v407
  %823 = vmatpush.bf16.msra.mxu0 %v404
  %824 = vmatpush.bf16.msra.mxu0 %v401
  %825 = vmatpush.bf16.msra.mxu0 %v398
  %826 = vmatpush.bf16.msra.mxu0 %v395
  %827 = vmatpush.bf16.msra.mxu0 %v392
  %828 = vmatpush.bf16.msra.mxu0 %v389
  %829 = vmatmul.bf16.gmra.mxu0 %v807
  %v830 = vpop.f32.mrf.mxu0
  %v831 = vadd.f32 0.0, %v830
  %v832 = vpop.f32.mrf.mxu0
  %833 = vdwg.mxu0
  %834 = vmatpush.bf16.msra.mxu0 %v411
  %835 = vmatpush.bf16.msra.mxu0 %v408
  %836 = vmatpush.bf16.msra.mxu0 %v405
  %837 = vmatpush.bf16.msra.mxu0 %v402
  %838 = vmatpush.bf16.msra.mxu0 %v399
  %839 = vmatpush.bf16.msra.mxu0 %v396
  %840 = vmatpush.bf16.msra.mxu0 %v393
  %841 = vmatpush.bf16.msra.mxu0 %v390
  %842 = vmatmul.bf16.gmra.mxu0 %v807
  %v843 = vpop.f32.mrf.mxu0
  %v844 = vadd.f32 0.0, %v843
  %v845 = vpop.f32.mrf.mxu0
  %846 = vdwg.mxu0
  %v847 = vadd.f32 %v804, %v818
  %v848 = vadd.f32 %v805, %v831
  %v849 = vxor.u32 %v847, 2147483648
  %v850 = vxor.u32 %v848, 2147483648
  %v851 = vmul.f32 %v849, 1.442695
  %v852 = vpow.pop %v851
  %v853 = vmul.f32 %v850, 1.442695
  %v854 = vpow.pop %v853
  %v855 = vadd.f32 %v852, 1.0
  %v856 = vadd.f32 %v854, 1.0
  %v857 = vrcp.pop %v855
  %v858 = vmul.f32 %v855, %v857
  %v859 = vsub.f32 1.0, %v858
  %v860 = vmul.f32 %v857, %v859
  %v861 = vadd.f32 %v857, %v860
  %vm862 = vweird.f32 %v855
  %vm863 = vweird.f32 %v857
  %vm864 = vmor %vm862, %vm863
  %v865 = vsel %vm864, %v857, %v861
  %v866 = vand.u32 2147483647, %v855
  %vm867 = vcmp.eq.f32.partialorder %v866, 8.507059e+37
  %v868 = vand.u32 %v855, 2147483648
  %v869 = vor.u32 1.1754944e-38, %v868
  %v870 = vsel %vm867, %v869, %v865
  %v871 = vmul.f32 1.0, %v870
  %v872 = vrcp.pop %v856
  %v873 = vmul.f32 %v856, %v872
  %v874 = vsub.f32 1.0, %v873
  %v875 = vmul.f32 %v872, %v874
  %v876 = vadd.f32 %v872, %v875
  %vm877 = vweird.f32 %v856
  %vm878 = vweird.f32 %v872
  %vm879 = vmor %vm877, %vm878
  %v880 = vsel %vm879, %v872, %v876
  %v881 = vand.u32 2147483647, %v856
  %vm882 = vcmp.eq.f32.partialorder %v881, 8.507059e+37
  %v883 = vand.u32 %v856, 2147483648
  %v884 = vor.u32 1.1754944e-38, %v883
  %v885 = vsel %vm882, %v884, %v880
  %v886 = vmul.f32 1.0, %v885
  %v887 = vadd.f32 %v844, %v294
  %v888 = vmul.f32 %v871, %v887
  %v889 = vadd.f32 %v806, %v888
  %v890 = vtanh.pop %v889
  %v891 = vsub.f32 %v800, %v890
  %v892 = vmul.f32 %v886, %v891
  %v893 = vadd.f32 %v890, %v892
  %s894 = smul.u32 6, 3
  %s895 = smul.addr %s894, 8
  %s896 = scalar_lea.vmem [#allocation2], %s895
  %v897 = vld [vmem:[%s896] sm:$0xff]
  %v898 = vld [vmem:[%s896 + $0x8] sm:$0xff]
  %v899 = vld [vmem:[%s896 + $0x10] sm:$0xff]
  %v900 = vpack.c.bf16 %v893, %v893
  %901 = vmatpush.bf16.msra.mxu0 %v409
  %902 = vmatpush.bf16.msra.mxu0 %v406
  %903 = vmatpush.bf16.msra.mxu0 %v403
  %904 = vmatpush.bf16.msra.mxu0 %v400
  %905 = vmatpush.bf16.msra.mxu0 %v397
  %906 = vmatpush.bf16.msra.mxu0 %v394
  %907 = vmatpush.bf16.msra.mxu0 %v391
  %908 = vmatpush.bf16.msra.mxu0 %v388
  %909 = vmatmul.bf16.gmra.mxu0 %v900
  %v910 = vpop.f32.mrf.mxu0
  %v911 = vadd.f32 0.0, %v910
  %v912 = vpop.f32.mrf.mxu0
  %913 = vdwg.mxu0
  %914 = vmatpush.bf16.msra.mxu0 %v410
  %915 = vmatpush.bf16.msra.mxu0 %v407
  %916 = vmatpush.bf16.msra.mxu0 %v404
  %917 = vmatpush.bf16.msra.mxu0 %v401
  %918 = vmatpush.bf16.msra.mxu0 %v398
  %919 = vmatpush.bf16.msra.mxu0 %v395
  %920 = vmatpush.bf16.msra.mxu0 %v392
  %921 = vmatpush.bf16.msra.mxu0 %v389
  %922 = vmatmul.bf16.gmra.mxu0 %v900
  %v923 = vpop.f32.mrf.mxu0
  %v924 = vadd.f32 0.0, %v923
  %v925 = vpop.f32.mrf.mxu0
  %926 = vdwg.mxu0
  %927 = vmatpush.bf16.msra.mxu0 %v411
  %928 = vmatpush.bf16.msra.mxu0 %v408
  %929 = vmatpush.bf16.msra.mxu0 %v405
  %930 = vmatpush.bf16.msra.mxu0 %v402
  %931 = vmatpush.bf16.msra.mxu0 %v399
  %932 = vmatpush.bf16.msra.mxu0 %v396
  %933 = vmatpush.bf16.msra.mxu0 %v393
  %934 = vmatpush.bf16.msra.mxu0 %v390
  %935 = vmatmul.bf16.gmra.mxu0 %v900
  %v936 = vpop.f32.mrf.mxu0
  %v937 = vadd.f32 0.0, %v936
  %v938 = vpop.f32.mrf.mxu0
  %939 = vdwg.mxu0
  %v940 = vadd.f32 %v897, %v911
  %v941 = vadd.f32 %v898, %v924
  %v942 = vxor.u32 %v940, 2147483648
  %v943 = vxor.u32 %v941, 2147483648
  %v944 = vmul.f32 %v942, 1.442695
  %v945 = vpow.pop %v944
  %v946 = vmul.f32 %v943, 1.442695
  %v947 = vpow.pop %v946
  %v948 = vadd.f32 %v945, 1.0
  %v949 = vadd.f32 %v947, 1.0
  %v950 = vrcp.pop %v948
  %v951 = vmul.f32 %v948, %v950
  %v952 = vsub.f32 1.0, %v951
  %v953 = vmul.f32 %v950, %v952
  %v954 = vadd.f32 %v950, %v953
  %vm955 = vweird.f32 %v948
  %vm956 = vweird.f32 %v950
  %vm957 = vmor %vm955, %vm956
  %v958 = vsel %vm957, %v950, %v954
  %v959 = vand.u32 2147483647, %v948
  %vm960 = vcmp.eq.f32.partialorder %v959, 8.507059e+37
  %v961 = vand.u32 %v948, 2147483648
  %v962 = vor.u32 1.1754944e-38, %v961
  %v963 = vsel %vm960, %v962, %v958
  %v964 = vmul.f32 1.0, %v963
  %v965 = vrcp.pop %v949
  %v966 = vmul.f32 %v949, %v965
  %v967 = vsub.f32 1.0, %v966
  %v968 = vmul.f32 %v965, %v967
  %v969 = vadd.f32 %v965, %v968
  %vm970 = vweird.f32 %v949
  %vm971 = vweird.f32 %v965
  %vm972 = vmor %vm970, %vm971
  %v973 = vsel %vm972, %v965, %v969
  %v974 = vand.u32 2147483647, %v949
  %vm975 = vcmp.eq.f32.partialorder %v974, 8.507059e+37
  %v976 = vand.u32 %v949, 2147483648
  %v977 = vor.u32 1.1754944e-38, %v976
  %v978 = vsel %vm975, %v977, %v973
  %v979 = vmul.f32 1.0, %v978
  %v980 = vadd.f32 %v937, %v294
  %v981 = vmul.f32 %v964, %v980
  %v982 = vadd.f32 %v899, %v981
  %v983 = vtanh.pop %v982
  %v984 = vsub.f32 %v893, %v983
  %v985 = vmul.f32 %v979, %v984
  %v986 = vadd.f32 %v983, %v985
  %s987 = smul.u32 7, 3
  %s988 = smul.addr %s987, 8
  %s989 = scalar_lea.vmem [#allocation2], %s988
  %v990 = vld [vmem:[%s989] sm:$0xff]
  %v991 = vld [vmem:[%s989 + $0x8] sm:$0xff]
  %v992 = vld [vmem:[%s989 + $0x10] sm:$0xff]
  %v993 = vpack.c.bf16 %v986, %v986
  %994 = vmatpush.bf16.msra.mxu0 %v409
  %995 = vmatpush.bf16.msra.mxu0 %v406
  %996 = vmatpush.bf16.msra.mxu0 %v403
  %997 = vmatpush.bf16.msra.mxu0 %v400
  %998 = vmatpush.bf16.msra.mxu0 %v397
  %999 = vmatpush.bf16.msra.mxu0 %v394
  %1000 = vmatpush.bf16.msra.mxu0 %v391
  %1001 = vmatpush.bf16.msra.mxu0 %v388
  %1002 = vmatmul.bf16.gmra.mxu0 %v993
  %v1003 = vpop.f32.mrf.mxu0
  %v1004 = vadd.f32 0.0, %v1003
  %v1005 = vpop.f32.mrf.mxu0
  %1006 = vdwg.mxu0
  %1007 = vmatpush.bf16.msra.mxu0 %v410
  %1008 = vmatpush.bf16.msra.mxu0 %v407
  %1009 = vmatpush.bf16.msra.mxu0 %v404
  %1010 = vmatpush.bf16.msra.mxu0 %v401
  %1011 = vmatpush.bf16.msra.mxu0 %v398
  %1012 = vmatpush.bf16.msra.mxu0 %v395
  %1013 = vmatpush.bf16.msra.mxu0 %v392
  %1014 = vmatpush.bf16.msra.mxu0 %v389
  %1015 = vmatmul.bf16.gmra.mxu0 %v993
  %v1016 = vpop.f32.mrf.mxu0
  %v1017 = vadd.f32 0.0, %v1016
  %v1018 = vpop.f32.mrf.mxu0
  %1019 = vdwg.mxu0
  %1020 = vmatpush.bf16.msra.mxu0 %v411
  %1021 = vmatpush.bf16.msra.mxu0 %v408
  %1022 = vmatpush.bf16.msra.mxu0 %v405
  %1023 = vmatpush.bf16.msra.mxu0 %v402
  %1024 = vmatpush.bf16.msra.mxu0 %v399
  %1025 = vmatpush.bf16.msra.mxu0 %v396
  %1026 = vmatpush.bf16.msra.mxu0 %v393
  %1027 = vmatpush.bf16.msra.mxu0 %v390
  %1028 = vmatmul.bf16.gmra.mxu0 %v993
  %v1029 = vpop.f32.mrf.mxu0
  %v1030 = vadd.f32 0.0, %v1029
  %v1031 = vpop.f32.mrf.mxu0
  %1032 = vdwg.mxu0
  %v1033 = vadd.f32 %v990, %v1004
  %v1034 = vadd.f32 %v991, %v1017
  %v1035 = vxor.u32 %v1033, 2147483648
  %v1036 = vxor.u32 %v1034, 2147483648
  %v1037 = vmul.f32 %v1035, 1.442695
  %v1038 = vpow.pop %v1037
  %v1039 = vmul.f32 %v1036, 1.442695
  %v1040 = vpow.pop %v1039
  %v1041 = vadd.f32 %v1038, 1.0
  %v1042 = vadd.f32 %v1040, 1.0
  %v1043 = vrcp.pop %v1041
  %v1044 = vmul.f32 %v1041, %v1043
  %v1045 = vsub.f32 1.0, %v1044
  %v1046 = vmul.f32 %v1043, %v1045
  %v1047 = vadd.f32 %v1043, %v1046
  %vm1048 = vweird.f32 %v1041
  %vm1049 = vweird.f32 %v1043
  %vm1050 = vmor %vm1048, %vm1049
  %v1051 = vsel %vm1050, %v1043, %v1047
  %v1052 = vand.u32 2147483647, %v1041
  %vm1053 = vcmp.eq.f32.partialorder %v1052, 8.507059e+37
  %v1054 = vand.u32 %v1041, 2147483648
  %v1055 = vor.u32 1.1754944e-38, %v1054
  %v1056 = vsel %vm1053, %v1055, %v1051
  %v1057 = vmul.f32 1.0, %v1056
  %v1058 = vrcp.pop %v1042
  %v1059 = vmul.f32 %v1042, %v1058
  %v1060 = vsub.f32 1.0, %v1059
  %v1061 = vmul.f32 %v1058, %v1060
  %v1062 = vadd.f32 %v1058, %v1061
  %vm1063 = vweird.f32 %v1042
  %vm1064 = vweird.f32 %v1058
  %vm1065 = vmor %vm1063, %vm1064
  %v1066 = vsel %vm1065, %v1058, %v1062
  %v1067 = vand.u32 2147483647, %v1042
  %vm1068 = vcmp.eq.f32.partialorder %v1067, 8.507059e+37
  %v1069 = vand.u32 %v1042, 2147483648
  %v1070 = vor.u32 1.1754944e-38, %v1069
  %v1071 = vsel %vm1068, %v1070, %v1066
  %v1072 = vmul.f32 1.0, %v1071
  %v1073 = vadd.f32 %v1030, %v294
  %v1074 = vmul.f32 %v1057, %v1073
  %v1075 = vadd.f32 %v992, %v1074
  %v1076 = vtanh.pop %v1075
  %v1077 = vsub.f32 %v986, %v1076
  %v1078 = vmul.f32 %v1072, %v1077
  %v1079 = vadd.f32 %v1076, %v1078
  %v1080 = vtanh.pop %v1079
  %v1081 = vpack.c.bf16 %v1080, %v1080
  %v1082 = vld [vmem:[%s5] sm:$0xf]
  %v1083 = vld [vmem:[%s5 + $0x4] sm:$0xf]
  %v1084 = vld [vmem:[%s5 + $0x8] sm:$0xf]
  %v1085 = vld [vmem:[%s5 + $0xc] sm:$0xf]
  %v1086 = vld [vmem:[%s5 + $0x10] sm:$0xf]
  %v1087 = vld [vmem:[%s5 + $0x14] sm:$0xf]
  %v1088 = vld [vmem:[%s5 + $0x18] sm:$0xf]
  %v1089 = vld [vmem:[%s5 + $0x1c] sm:$0xf]
  %v1090 = vld [vmem:[%s5 + $0x20] sm:$0xf]
  %v1091 = vld [vmem:[%s5 + $0x24] sm:$0xf]
  %v1092 = vld [vmem:[%s5 + $0x28] sm:$0xf]
  %v1093 = vld [vmem:[%s5 + $0x2c] sm:$0xf]
  %v1094 = vld [vmem:[%s5 + $0x30] sm:$0xf]
  %v1095 = vld [vmem:[%s5 + $0x34] sm:$0xf]
  %v1096 = vld [vmem:[%s5 + $0x38] sm:$0xf]
  %v1097 = vld [vmem:[%s5 + $0x3c] sm:$0xf]
  %v1098 = vld [vmem:[%s6] sm:$0x1]
  %v1100 = vperm.slane %v1098, 0
  %v1118 = vunpack.c.l.b16 %v1082
  %v1119 = vunpack.c.l.b16 %v1083
  %v1120 = vunpack.c.l.b16 %v1084
  %v1121 = vunpack.c.l.b16 %v1085
  %v1122 = vunpack.c.l.b16 %v1086
  %v1123 = vunpack.c.l.b16 %v1087
  %v1124 = vunpack.c.l.b16 %v1088
  %v1125 = vunpack.c.l.b16 %v1089
  %v1126 = vunpack.c.l.b16 %v1090
  %v1127 = vunpack.c.l.b16 %v1091
  %v1128 = vunpack.c.l.b16 %v1092
  %v1129 = vunpack.c.l.b16 %v1093
  %v1130 = vunpack.c.l.b16 %v1094
  %v1131 = vunpack.c.l.b16 %v1095
  %v1132 = vunpack.c.l.b16 %v1096
  %v1133 = vunpack.c.l.b16 %v1097
  %v1134 = vpack.c.b16 %v1119, %v1118
  %v1135 = vpack.c.b16 %v1121, %v1120
  %v1136 = vpack.c.b16 %v1123, %v1122
  %v1137 = vpack.c.b16 %v1125, %v1124
  %v1138 = vpack.c.b16 %v1127, %v1126
  %v1139 = vpack.c.b16 %v1129, %v1128
  %v1140 = vpack.c.b16 %v1131, %v1130
  %v1141 = vpack.c.b16 %v1133, %v1132
  %1150 = vmatpush.bf16.msra.mxu0 %v1141
  %1151 = vmatpush.bf16.msra.mxu0 %v1140
  %1152 = vmatpush.bf16.msra.mxu0 %v1139
  %1153 = vmatpush.bf16.msra.mxu0 %v1138
  %1154 = vmatpush.bf16.msra.mxu0 %v1137
  %1155 = vmatpush.bf16.msra.mxu0 %v1136
  %1156 = vmatpush.bf16.msra.mxu0 %v1135
  %1157 = vmatpush.bf16.msra.mxu0 %v1134
  %1158 = vmatmul.bf16.gmra.mxu0 %v1081
  %v1159 = vpop.f32.mrf.mxu0
  %v1160 = vadd.f32 %v1100, %v1159
  %v1161 = vpop.f32.mrf.mxu0
  %1162 = vdwg.mxu0
  %v1163 = vtanh.pop %v1160
  %v1164 = vpack.c.bf16 %v1163, %v1163
  %v1165 = vld [vmem:[%s7] sm:$0xf]
  %v1166 = vld [vmem:[%s7 + $0x4] sm:$0xf]
  %v1167 = vld [vmem:[%s7 + $0x8] sm:$0xf]
  %v1168 = vld [vmem:[%s7 + $0xc] sm:$0xf]
  %v1169 = vld [vmem:[%s7 + $0x10] sm:$0xf]
  %v1170 = vld [vmem:[%s7 + $0x14] sm:$0xf]
  %v1171 = vld [vmem:[%s7 + $0x18] sm:$0xf]
  %v1172 = vld [vmem:[%s7 + $0x1c] sm:$0xf]
  %v1173 = vld [vmem:[%s7 + $0x20] sm:$0xf]
  %v1174 = vld [vmem:[%s7 + $0x24] sm:$0xf]
  %v1175 = vld [vmem:[%s7 + $0x28] sm:$0xf]
  %v1176 = vld [vmem:[%s7 + $0x2c] sm:$0xf]
  %v1177 = vld [vmem:[%s7 + $0x30] sm:$0xf]
  %v1178 = vld [vmem:[%s7 + $0x34] sm:$0xf]
  %v1179 = vld [vmem:[%s7 + $0x38] sm:$0xf]
  %v1180 = vld [vmem:[%s7 + $0x3c] sm:$0xf]
  %v1181 = vld [vmem:[%s8] sm:$0x1]
  %v1183 = vperm.slane %v1181, 0
  %v1201 = vunpack.c.l.b16 %v1165
  %v1202 = vunpack.c.l.b16 %v1166
  %v1203 = vunpack.c.l.b16 %v1167
  %v1204 = vunpack.c.l.b16 %v1168
  %v1205 = vunpack.c.l.b16 %v1169
  %v1206 = vunpack.c.l.b16 %v1170
  %v1207 = vunpack.c.l.b16 %v1171
  %v1208 = vunpack.c.l.b16 %v1172
  %v1209 = vunpack.c.l.b16 %v1173
  %v1210 = vunpack.c.l.b16 %v1174
  %v1211 = vunpack.c.l.b16 %v1175
  %v1212 = vunpack.c.l.b16 %v1176
  %v1213 = vunpack.c.l.b16 %v1177
  %v1214 = vunpack.c.l.b16 %v1178
  %v1215 = vunpack.c.l.b16 %v1179
  %v1216 = vunpack.c.l.b16 %v1180
  %v1217 = vpack.c.b16 %v1202, %v1201
  %v1218 = vpack.c.b16 %v1204, %v1203
  %v1219 = vpack.c.b16 %v1206, %v1205
  %v1220 = vpack.c.b16 %v1208, %v1207
  %v1221 = vpack.c.b16 %v1210, %v1209
  %v1222 = vpack.c.b16 %v1212, %v1211
  %v1223 = vpack.c.b16 %v1214, %v1213
  %v1224 = vpack.c.b16 %v1216, %v1215
  %1233 = vmatpush.bf16.msra.mxu0 %v1224
  %1234 = vmatpush.bf16.msra.mxu0 %v1223
  %1235 = vmatpush.bf16.msra.mxu0 %v1222
  %1236 = vmatpush.bf16.msra.mxu0 %v1221
  %1237 = vmatpush.bf16.msra.mxu0 %v1220
  %1238 = vmatpush.bf16.msra.mxu0 %v1219
  %1239 = vmatpush.bf16.msra.mxu0 %v1218
  %1240 = vmatpush.bf16.msra.mxu0 %v1217
  %1241 = vmatmul.bf16.gmra.mxu0 %v1164
  %v1242 = vpop.f32.mrf.mxu0
  %v1243 = vadd.f32 %v1183, %v1242
  %v1244 = vpop.f32.mrf.mxu0
  %1245 = vdwg.mxu0
  %v1246 = vld [vmem:[%s9] sm:$0x1]
  %v1248 = vperm.slane %v1246, 0
  %v1250 = vmul.f32 %v1243, %v1248
  %v1251 = vld [vmem:[%s10] sm:$0x1]
  %v1253 = vperm.slane %v1251, 0
  %v1255 = vadd.f32 %v1250, %v1253
  %vm1256 = vcmask 64512
  %1257 = vst.msk [vmem:[%s11] sm:$0xff] %vm1256, %v1255
  // Predicated region
  $region46: #{gru_network_forward.1} parent=0 // pred_check
    _
  $region47: #{gru_network_forward.1} parent=0 // pred_check_branch
    %1259 = sbr.rel (0) target = $region49
  $region48: #{gru_network_forward.1} parent=0 // pred_region
    _
  $region49: #{gru_network_forward.1} parent=0 // pred_fallthru
    _
  // Predicated region
  $region50: #{gru_network_forward.1} parent=0 // pred_check
    _
  $region51: #{gru_network_forward.1} parent=0 // pred_check_branch
    %1261 = sbr.rel (0) target = $region53
  $region52: #{gru_network_forward.1} parent=0 // pred_region
    _
  $region53: #{gru_network_forward.1} parent=0 // pred_fallthru
    _

</llo_original>
